<compile_context>
chip_gen: v5e
topology: v5e:2x2
jax: 0.10.0
libtpu: 0.0.40
codegen_flags: <defaults>
</compile_context>

<pallas_src>
import functools

import jax
import jax.numpy as jnp
import numpy as np
from jax import lax
from jax.experimental import pallas as pl
from jax.experimental.pallas import tpu as pltpu


def _round_up(n, m):
    return ((n + m - 1) // m) * m


def _tpu_vmem_capacity_bytes():
    try:
        return int(pltpu.get_tpu_info().vmem_capacity_bytes)
    except Exception:
        return 64 << 20  # conservative fallback (safe on v5e/v6e/v7x)


def _vmem_limit_bytes(tb, D, H_pad, th, weight_bufs, x_dtype, compute_dtype,
                      acts_dtype):
    cb = jnp.dtype(compute_dtype).itemsize
    ab = jnp.dtype(acts_dtype).itemsize
    xb = jnp.dtype(x_dtype).itemsize
    weights = weight_bufs * 2 * D * th * cb            # W_enc^T tile + W_dec^T tile
    biases = 2 * th * 4 + 2 * D * 4 + 2 * 128 * 4
    x_io = 2 * tb * D * xb                              # double-buffered x tile
    acts_io = 2 * tb * th * ab                          # double-buffered acts tile
    err_io = 2 * tb * 128 * 4                           # lane-dense err slab
    scratch = tb * H_pad * 4 + tb * 128 * 4 + tb * D * 4
    # live temporaries: k-scan masked copy of post, acts tile (f32 + compute), recon
    work = tb * H_pad * 4 + tb * th * (4 + cb) + tb * D * (4 + cb)
    need = weights + biases + x_io + acts_io + err_io + scratch + work
    cap = _tpu_vmem_capacity_bytes()
    return int(min(max(1.4 * need + (8 << 20), 24 << 20), 0.87 * cap))


def _topk_sae_kernel(k, n_h, compute_dtype,
                     x_ref, wenc_ref, benc_ref, wdec_ref, bdec_ref,
                     acts_ref, err_ref,
                     post_scr, thr_scr, recon_scr):
    p = pl.program_id(1)   # 0: encoder pass over H tiles, 1: threshold + decoder
    h = pl.program_id(2)   # H-tile index

    # ---- phase 0: post[h-tile] = x @ W_enc^T[:, h-tile] + b_enc'[h-tile] ----
    @pl.when(p == 0)
    def _encode():
        x_c = x_ref[...].astype(compute_dtype)                       # [TB, D]
        post_scr[h] = (jnp.dot(x_c, wenc_ref[...],
                               preferred_element_type=jnp.float32)
                       + benc_ref[...])                              # [TB, TH] f32

    # ---- phase 1: top-k threshold (once), then acts + decoder per H tile ----
    @pl.when(p == 1)
    def _decode():
        @pl.when(h == 0)
        def _threshold():
            post_all = post_scr[...]                                 # [nH, TB, TH]
            neg_inf = jnp.float32(-jnp.inf)

            def body(_, thr):
                below = jnp.where(post_all < thr[jnp.newaxis], post_all, neg_inf)
                m = jnp.max(below, axis=0)                           # [TB, TH]
                return jnp.max(m, axis=-1, keepdims=True)            # [TB, 1]

            thr0 = jnp.full((post_all.shape[1], 1), jnp.inf, jnp.float32)
            # k passes of "largest value strictly below thr" -> k-th largest value.
            thr_scr[...] = lax.fori_loop(0, k, body, thr0, unroll=True)
            recon_scr[...] = jnp.zeros_like(recon_scr)

        thr = thr_scr[...]                                           # [TB, 1] f32
        post_t = post_scr[h]                                         # [TB, TH] f32
        # f32 compare against an f32 threshold, relu folded in.
        acts_f = jnp.where(post_t >= thr, jnp.maximum(post_t, 0.0), 0.0)
        acts_c = acts_f.astype(compute_dtype)                        # single cast
        if jnp.dtype(acts_ref.dtype) == jnp.dtype(compute_dtype):
            acts_ref[...] = acts_c                                   # reuse below
        else:
            acts_ref[...] = acts_f.astype(acts_ref.dtype)
        recon_scr[...] += jnp.dot(acts_c, wdec_ref[...],
                                  preferred_element_type=jnp.float32)

        @pl.when(h == n_h - 1)
        def _finalize():
            recon = recon_scr[...] + bdec_ref[...]                   # [TB, D] f32
            diff = recon - x_ref[...].astype(jnp.float32)
            err = jnp.sum(diff * diff, axis=-1, keepdims=True)       # [TB, 1]
            # lane-dense slab store (unmasked vst); wrapper keeps column 0.
            err_ref[...] = jnp.broadcast_to(err, err_ref.shape)


def _build_call(B_pad, D, H_pad, tb, th, k, x_dtype, compute_dtype, acts_dtype,
                core_parallel_batch):
    n_h = H_pad // th
    n_b = B_pad // tb
    # Grid-invariant weights (single H tile): keep exactly one resident copy.
    weight_bufs = 1 if n_h == 1 else 2
    w_mode = dict(pipeline_mode=pl.Buffered(1)) if n_h == 1 else {}

    in_specs = [
        pl.BlockSpec((tb, D), lambda i, p, h: (i, 0)),                      # x
        pl.BlockSpec((D, th), lambda i, p, h: (0, h * (1 - p)), **w_mode),  # W_enc^T
        pl.BlockSpec((1, th), lambda i, p, h: (0, h * (1 - p))),            # b_enc'
        pl.BlockSpec((th, D), lambda i, p, h: (h * p, 0), **w_mode),        # W_dec^T
        pl.BlockSpec((1, D), lambda i, p, h: (0, 0)),                       # b_dec
    ]
    out_specs = [
        pl.BlockSpec((tb, th), lambda i, p, h: (i, h * p)),                 # acts
        pl.BlockSpec((tb, 128), lambda i, p, h: (i, 0)),                    # l2 slab
    ]
    scratch_shapes = [
        pltpu.VMEM((n_h, tb, th), jnp.float32),   # post (full H row per batch tile)
        pltpu.VMEM((tb, 1), jnp.float32),         # top-k threshold
        pltpu.VMEM((tb, D), jnp.float32),         # reconstruction accumulator
    ]

    sem0 = pltpu.CORE_PARALLEL if core_parallel_batch else pltpu.PARALLEL
    return pl.pallas_call(
        functools.partial(_topk_sae_kernel, k, n_h, compute_dtype),
        out_shape=(
            jax.ShapeDtypeStruct((B_pad, H_pad), acts_dtype),
            jax.ShapeDtypeStruct((B_pad, 128), jnp.float32),
        ),
        grid_spec=pltpu.PrefetchScalarGridSpec(
            num_scalar_prefetch=0,
            grid=(n_b, 2, n_h),
            in_specs=in_specs,
            out_specs=out_specs,
            scratch_shapes=scratch_shapes,
        ),
        compiler_params=pltpu.CompilerParams(
            dimension_semantics=(sem0, pltpu.ARBITRARY, pltpu.ARBITRARY),
            vmem_limit_bytes=_vmem_limit_bytes(
                tb, D, H_pad, th, weight_bufs, x_dtype, compute_dtype, acts_dtype),
        ),
    )


def topk_autoencoder_forward(x, w_enc, b_enc, w_dec, b_dec, k, *,
                             tb=256, th=512, compute_dtype=jnp.bfloat16,
                             acts_dtype=None, core_parallel_batch=False):
    """Returns (loss, acts, penalty, l2_error_per_sample) like the torch module.

    tb: batch tile (default 256 for v6e/v7x 256x256 MXUs; use 128 on v5e).
    th: H tile streamed through VMEM (multiple of 128); weights never fully reside.
    compute_dtype: MXU operand dtype (accumulation / top-k / error are always f32).
    acts_dtype: dtype of the dense acts output (defaults to compute_dtype).
    core_parallel_batch: shard the batch grid axis across TensorCores (v7x).
    """
    B, D = x.shape
    H = w_enc.shape[0]
    if acts_dtype is None:
        acts_dtype = compute_dtype

    # ---- batch tiling: one tile if the batch fits, else a 128-multiple tile ----
    tb_req = max(8, (int(tb) // 8) * 8)
    b8 = _round_up(B, 8)
    if b8 <= tb_req:
        tb_eff = b8
    else:
        tb_eff = max(128, (tb_req // 128) * 128)
    B_pad = _round_up(B, tb_eff)   # padded rows are wasted work but sliced off

    # ---- hidden (H) tiling ----
    th_eff = max(128, (int(th) // 128) * 128)
    th_eff = min(th_eff, _round_up(H, 128))
    H_pad = _round_up(H, th_eff)

    f32 = jnp.float32
    w_enc_f = w_enc.astype(f32)
    b_enc_f = b_enc.astype(f32).reshape(-1)
    b_dec_f = b_dec.astype(f32).reshape(-1)

    # Fold decoder-bias centering into the encoder bias (f32):
    #   (x - b_dec) @ W_enc^T + b_enc == x @ W_enc^T + (b_enc - b_dec @ W_enc^T)
    b_enc_fold = b_enc_f - jnp.dot(b_dec_f, w_enc_f.T)               # [H]

    w_enc_t = w_enc_f.T.astype(compute_dtype)                        # [D, H]
    w_dec_t = w_dec.astype(f32).T.astype(compute_dtype)              # [H, D]

    if H_pad != H:
        w_enc_t = jnp.pad(w_enc_t, ((0, 0), (0, H_pad - H)))
        w_dec_t = jnp.pad(w_dec_t, ((0, H_pad - H), (0, 0)))
        # Padded hidden columns get a huge negative bias -> never in the top-k.
        b_enc_fold = jnp.pad(b_enc_fold, (0, H_pad - H), constant_values=-1e30)

    x_in = x                                     # keep native dtype (no f32 upcast)
    if B_pad != B:
        x_in = jnp.pad(x_in, ((0, B_pad - B), (0, 0)))

    b_enc2 = b_enc_fold.reshape(1, H_pad)
    b_dec2 = b_dec_f.reshape(1, D)

    call = _build_call(B_pad, D, H_pad, tb_eff, th_eff, k, x_in.dtype,
                       compute_dtype, acts_dtype, core_parallel_batch)
    acts, err_slab = call(x_in, w_enc_t, b_enc2, w_dec_t, b_dec2)

    acts = acts[:B, :H]
    l2_per_sample = err_slab[:B, :1]                                 # [B, 1] f32
    loss = jnp.mean(l2_per_sample, axis=0)                           # [1]
    penalty = jnp.array(0.0, jnp.float32)                            # coeff is None
    return loss, acts, penalty, l2_per_sample


def _init_params(key, input_dim, d_hidden):
    """Deterministic init mimicking the module: kaiming_uniform weights, zero
    biases, decoder rows normalized to unit norm."""
    k1, k2 = jax.random.split(key)
    bound_enc = np.sqrt(6.0 / input_dim)
    bound_dec = np.sqrt(6.0 / d_hidden)
    w_enc = jax.random.uniform(k1, (d_hidden, input_dim), jnp.float32,
                               -bound_enc, bound_enc)
    w_dec = jax.random.uniform(k2, (input_dim, d_hidden), jnp.float32,
                               -bound_dec, bound_dec)
    w_dec = w_dec / jnp.linalg.norm(w_dec, axis=-1, keepdims=True)
    b_enc = jnp.zeros((d_hidden,), jnp.float32)
    b_dec = jnp.zeros((input_dim,), jnp.float32)
    return w_enc, b_enc, w_dec, b_dec


def _reference(x, w_enc, b_enc, w_dec, b_dec, k, compute_dtype=jnp.float32):
    """Pure-JAX reference faithful to the torch forward."""
    x = x.astype(jnp.float32)
    x_cent = x - b_dec.astype(jnp.float32)
    post = jnp.dot(x_cent.astype(compute_dtype),
                   jnp.transpose(w_enc).astype(compute_dtype),
                   preferred_element_type=jnp.float32) + b_enc.astype(jnp.float32)
    vals, idx = lax.top_k(post, k)
    vals = jnp.maximum(vals, 0.0)
    acts = jnp.zeros_like(post).at[jnp.arange(x.shape[0])[:, None], idx].set(vals)
    recon = jnp.dot(acts.astype(compute_dtype),
                    jnp.transpose(w_dec).astype(compute_dtype),
                    preferred_element_type=jnp.float32) + b_dec.astype(jnp.float32)
    err = jnp.sum((recon - x) ** 2, axis=-1, keepdims=True)
    return jnp.mean(err, axis=0), acts, err


if __name__ == "__main__":
    B, D_IN, D_HID, K = 64, 128, 256, 8
    key = jax.random.PRNGKey(0)
    kx, kp, kb1, kb2 = jax.random.split(key, 4)
    x = jax.random.normal(kx, (B, D_IN), jnp.float32)
    w_enc, _, w_dec, _ = _init_params(kp, D_IN, D_HID)
    # Non-zero biases exercise the bias-folding path.
    b_enc = 0.1 * jax.random.normal(kb1, (D_HID,), jnp.float32)
    b_dec = 0.1 * jax.random.normal(kb2, (D_IN,), jnp.float32)

    ref_loss, ref_acts, ref_err = _reference(x, w_enc, b_enc, w_dec, b_dec, K,
                                             jnp.float32)

    # 1) f32 compute, single H tile (weights resident via pl.Buffered(1)).
    loss, acts, penalty, err = topk_autoencoder_forward(
        x, w_enc, b_enc, w_dec, b_dec, K, compute_dtype=jnp.float32)
    jax.block_until_ready((loss, acts, penalty, err))
    np.testing.assert_allclose(np.asarray(acts), np.asarray(ref_acts),
                               rtol=1e-4, atol=1e-4)
    np.testing.assert_allclose(np.asarray(err), np.asarray(ref_err),
                               rtol=1e-4, atol=1e-3)
    np.testing.assert_allclose(np.asarray(loss), np.asarray(ref_loss),
                               rtol=1e-4, atol=1e-3)

    # 2) H-streaming path: th=128 -> 2 H tiles, weights double-buffered over grid.
    loss_s, acts_s, _, err_s = topk_autoencoder_forward(
        x, w_enc, b_enc, w_dec, b_dec, K, th=128, compute_dtype=jnp.float32)
    jax.block_until_ready((loss_s, acts_s, err_s))
    np.testing.assert_allclose(np.asarray(acts_s), np.asarray(ref_acts),
                               rtol=1e-4, atol=1e-4)
    np.testing.assert_allclose(np.asarray(err_s), np.asarray(ref_err),
                               rtol=1e-4, atol=1e-3)

    # 3) bf16 MXU path (default dtypes), zero biases like the module init.
    zb_enc = jnp.zeros((D_HID,), jnp.float32)
    zb_dec = jnp.zeros((D_IN,), jnp.float32)
    ref_loss16, _, ref_err16 = _reference(x, w_enc, zb_enc, w_dec, zb_dec, K,
                                          jnp.bfloat16)
    loss16, acts16, _, err16 = topk_autoencoder_forward(
        x, w_enc, zb_enc, w_dec, zb_dec, K, th=128)
    jax.block_until_ready((loss16, acts16, err16))
    assert acts16.shape == (B, D_HID)
    np.testing.assert_allclose(np.asarray(err16), np.asarray(ref_err16),
                               rtol=5e-2, atol=5e-2)
    np.testing.assert_allclose(np.asarray(loss16), np.asarray(ref_loss16),
                               rtol=5e-2, atol=5e-2)

    # 4) ragged batch: exercises the batch-padding path.
    loss_r, acts_r, _, err_r = topk_autoencoder_forward(
        x[:50], w_enc, b_enc, w_dec, b_dec, K, compute_dtype=jnp.float32)
    jax.block_until_ready((loss_r, acts_r, err_r))
    np.testing.assert_allclose(np.asarray(err_r), np.asarray(ref_err)[:50],
                               rtol=1e-4, atol=1e-3)

    print("KERNEL_OK")
</pallas_src>

<mosaic_0001>
module attributes {stable_mosaic.version = 11 : i64} {
  func.func @_topk_sae_kernel(%arg0: i32, %arg1: i32, %arg2: i32, %arg3: memref<64x128xf32, #tpu.memory_space<vmem>>, %arg4: memref<128x256xf32, #tpu.memory_space<vmem>>, %arg5: memref<1x256xf32, #tpu.memory_space<vmem>>, %arg6: memref<256x128xf32, #tpu.memory_space<vmem>>, %arg7: memref<1x128xf32, #tpu.memory_space<vmem>>, %arg8: memref<64x256xf32, #tpu.memory_space<vmem>>, %arg9: memref<64x128xf32, #tpu.memory_space<vmem>>, %arg10: memref<1x64x256xf32, #tpu.memory_space<vmem>>, %arg11: memref<64x1xf32, #tpu.memory_space<vmem>>, %arg12: memref<64x128xf32, #tpu.memory_space<vmem>>) attributes {dimension_semantics = [#tpu.dimension_semantics<parallel>, #tpu.dimension_semantics<arbitrary>, #tpu.dimension_semantics<arbitrary>], iteration_bounds = array<i64: 1, 2, 1>, scalar_prefetch = 0 : i64, scratch_operands = 3 : i64, tpu.core_type = #tpu.core_type<tc>, window_params = [{transform_indices = @transform_0, window_bounds = array<i64: 64, 128>}, {pipeline_mode = #tpu.pipeline_mode<synchronous>, transform_indices = @transform_1, window_bounds = array<i64: 128, 256>}, {transform_indices = @transform_2, window_bounds = array<i64: 1, 256>}, {pipeline_mode = #tpu.pipeline_mode<synchronous>, transform_indices = @transform_3, window_bounds = array<i64: 256, 128>}, {pipeline_mode = #tpu.pipeline_mode<synchronous>, transform_indices = @transform_4, window_bounds = array<i64: 1, 128>}, {transform_indices = @transform_5, window_bounds = array<i64: 64, 256>}, {transform_indices = @transform_6, window_bounds = array<i64: 64, 128>}]} {
    %c0_i32 = arith.constant 0 : i32
    %0 = arith.cmpi eq, %arg1, %c0_i32 : i32
    %1 = arith.extui %0 : i1 to i32
    %c0_i32_0 = arith.constant 0 : i32
    %2 = arith.cmpi ne, %1, %c0_i32_0 : i32
    scf.if %2 {
      %c0 = arith.constant 0 : index
      %c0_2 = arith.constant 0 : index
      %6 = vector.load %arg3[%c0, %c0_2] : memref<64x128xf32, #tpu.memory_space<vmem>>, vector<64x128xf32>
      %c0_3 = arith.constant 0 : index
      %c0_4 = arith.constant 0 : index
      %7 = vector.load %arg4[%c0_3, %c0_4] : memref<128x256xf32, #tpu.memory_space<vmem>>, vector<128x256xf32>
      %cst = arith.constant dense<0.000000e+00> : vector<64x256xf32>
      %8 = tpu.matmul %6, %7, %cst {dimension_numbers = #tpu.dot_dimension_numbers<[1], [0], [0], [1], [0, 0, 1, 1], [], []>} : vector<64x128xf32>, vector<128x256xf32>, vector<64x256xf32> -> vector<64x256xf32>
      %c0_5 = arith.constant 0 : index
      %c0_6 = arith.constant 0 : index
      %9 = vector.load %arg5[%c0_5, %c0_6] : memref<1x256xf32, #tpu.memory_space<vmem>>, vector<1x256xf32>
      %10 = vector.broadcast %9 : vector<1x256xf32> to vector<64x256xf32>
      %11 = arith.addf %8, %10 : vector<64x256xf32>
      %12 = arith.index_cast %arg2 : i32 to index
      %c0_7 = arith.constant 0 : index
      %c0_8 = arith.constant 0 : index
      %13 = vector.load %arg10[%12, %c0_7, %c0_8] : memref<1x64x256xf32, #tpu.memory_space<vmem>>, vector<1x64x256xf32>
      %14 = vector.shape_cast %13 : vector<1x64x256xf32> to vector<64x256xf32>
      %15 = vector.shape_cast %11 : vector<64x256xf32> to vector<1x64x256xf32>
      tpu.vector_store %arg10[%12, %c0_7, %c0_8], %15 {strides = array<i32>} : memref<1x64x256xf32, #tpu.memory_space<vmem>>, vector<1x64x256xf32>,
    } else {
    }
    %c1_i32 = arith.constant 1 : i32
    %3 = arith.cmpi eq, %arg1, %c1_i32 : i32
    %4 = arith.extui %3 : i1 to i32
    %c0_i32_1 = arith.constant 0 : i32
    %5 = arith.cmpi ne, %4, %c0_i32_1 : i32
    scf.if %5 {
      %c0_i32_2 = arith.constant 0 : i32
      %6 = arith.cmpi eq, %arg2, %c0_i32_2 : i32
      %7 = arith.extui %6 : i1 to i32
      %c0_i32_3 = arith.constant 0 : i32
      %8 = arith.cmpi ne, %7, %c0_i32_3 : i32
      scf.if %8 {
        %c0_19 = arith.constant 0 : index
        %c0_20 = arith.constant 0 : index
        %c0_21 = arith.constant 0 : index
        %28 = vector.load %arg10[%c0_19, %c0_20, %c0_21] : memref<1x64x256xf32, #tpu.memory_space<vmem>>, vector<1x64x256xf32>
        %cst_22 = arith.constant 0x7F800000 : f32
        %29 = vector.broadcast %cst_22 : f32 to vector<64x1xf32>
        %cst_23 = arith.constant 0xFF800000 : f32
        %c0_i32_24 = arith.constant 0 : i32
        %30 = vector.shape_cast %29 : vector<64x1xf32> to vector<1x64x1xf32>
        %31 = vector.broadcast %30 : vector<1x64x1xf32> to vector<1x64x256xf32>
        %32 = arith.cmpf olt, %28, %31 : vector<1x64x256xf32>
        %33 = vector.broadcast %cst_23 : f32 to vector<1x64x256xf32>
        %34 = arith.select %32, %28, %33 : vector<1x64x256xi1>, vector<1x64x256xf32>
        %cst_25 = arith.constant dense<0xFF800000> : vector<64x256xf32>
        %35 = vector.multi_reduction <maximumf>, %34, %cst_25 [0] : vector<1x64x256xf32> to vector<64x256xf32>
        %cst_26 = arith.constant dense<0xFF800000> : vector<64xf32>
        %36 = vector.multi_reduction <maximumf>, %35, %cst_26 [1] : vector<64x256xf32> to vector<64xf32>
        %37 = vector.shape_cast %36 : vector<64xf32> to vector<64x1xf32>
        %c1_i32_27 = arith.constant 1 : i32
        %38 = vector.shape_cast %37 : vector<64x1xf32> to vector<1x64x1xf32>
        %39 = vector.broadcast %38 : vector<1x64x1xf32> to vector<1x64x256xf32>
        %40 = arith.cmpf olt, %28, %39 : vector<1x64x256xf32>
        %41 = vector.broadcast %cst_23 : f32 to vector<1x64x256xf32>
        %42 = arith.select %40, %28, %41 : vector<1x64x256xi1>, vector<1x64x256xf32>
        %cst_28 = arith.constant dense<0xFF800000> : vector<64x256xf32>
        %43 = vector.multi_reduction <maximumf>, %42, %cst_28 [0] : vector<1x64x256xf32> to vector<64x256xf32>
        %cst_29 = arith.constant dense<0xFF800000> : vector<64xf32>
        %44 = vector.multi_reduction <maximumf>, %43, %cst_29 [1] : vector<64x256xf32> to vector<64xf32>
        %45 = vector.shape_cast %44 : vector<64xf32> to vector<64x1xf32>
        %c2_i32 = arith.constant 2 : i32
        %46 = vector.shape_cast %45 : vector<64x1xf32> to vector<1x64x1xf32>
        %47 = vector.broadcast %46 : vector<1x64x1xf32> to vector<1x64x256xf32>
        %48 = arith.cmpf olt, %28, %47 : vector<1x64x256xf32>
        %49 = vector.broadcast %cst_23 : f32 to vector<1x64x256xf32>
        %50 = arith.select %48, %28, %49 : vector<1x64x256xi1>, vector<1x64x256xf32>
        %cst_30 = arith.constant dense<0xFF800000> : vector<64x256xf32>
        %51 = vector.multi_reduction <maximumf>, %50, %cst_30 [0] : vector<1x64x256xf32> to vector<64x256xf32>
        %cst_31 = arith.constant dense<0xFF800000> : vector<64xf32>
        %52 = vector.multi_reduction <maximumf>, %51, %cst_31 [1] : vector<64x256xf32> to vector<64xf32>
        %53 = vector.shape_cast %52 : vector<64xf32> to vector<64x1xf32>
        %c3_i32 = arith.constant 3 : i32
        %54 = vector.shape_cast %53 : vector<64x1xf32> to vector<1x64x1xf32>
        %55 = vector.broadcast %54 : vector<1x64x1xf32> to vector<1x64x256xf32>
        %56 = arith.cmpf olt, %28, %55 : vector<1x64x256xf32>
        %57 = vector.broadcast %cst_23 : f32 to vector<1x64x256xf32>
        %58 = arith.select %56, %28, %57 : vector<1x64x256xi1>, vector<1x64x256xf32>
        %cst_32 = arith.constant dense<0xFF800000> : vector<64x256xf32>
        %59 = vector.multi_reduction <maximumf>, %58, %cst_32 [0] : vector<1x64x256xf32> to vector<64x256xf32>
        %cst_33 = arith.constant dense<0xFF800000> : vector<64xf32>
        %60 = vector.multi_reduction <maximumf>, %59, %cst_33 [1] : vector<64x256xf32> to vector<64xf32>
        %61 = vector.shape_cast %60 : vector<64xf32> to vector<64x1xf32>
        %c4_i32 = arith.constant 4 : i32
        %62 = vector.shape_cast %61 : vector<64x1xf32> to vector<1x64x1xf32>
        %63 = vector.broadcast %62 : vector<1x64x1xf32> to vector<1x64x256xf32>
        %64 = arith.cmpf olt, %28, %63 : vector<1x64x256xf32>
        %65 = vector.broadcast %cst_23 : f32 to vector<1x64x256xf32>
        %66 = arith.select %64, %28, %65 : vector<1x64x256xi1>, vector<1x64x256xf32>
        %cst_34 = arith.constant dense<0xFF800000> : vector<64x256xf32>
        %67 = vector.multi_reduction <maximumf>, %66, %cst_34 [0] : vector<1x64x256xf32> to vector<64x256xf32>
        %cst_35 = arith.constant dense<0xFF800000> : vector<64xf32>
        %68 = vector.multi_reduction <maximumf>, %67, %cst_35 [1] : vector<64x256xf32> to vector<64xf32>
        %69 = vector.shape_cast %68 : vector<64xf32> to vector<64x1xf32>
        %c5_i32 = arith.constant 5 : i32
        %70 = vector.shape_cast %69 : vector<64x1xf32> to vector<1x64x1xf32>
        %71 = vector.broadcast %70 : vector<1x64x1xf32> to vector<1x64x256xf32>
        %72 = arith.cmpf olt, %28, %71 : vector<1x64x256xf32>
        %73 = vector.broadcast %cst_23 : f32 to vector<1x64x256xf32>
        %74 = arith.select %72, %28, %73 : vector<1x64x256xi1>, vector<1x64x256xf32>
        %cst_36 = arith.constant dense<0xFF800000> : vector<64x256xf32>
        %75 = vector.multi_reduction <maximumf>, %74, %cst_36 [0] : vector<1x64x256xf32> to vector<64x256xf32>
        %cst_37 = arith.constant dense<0xFF800000> : vector<64xf32>
        %76 = vector.multi_reduction <maximumf>, %75, %cst_37 [1] : vector<64x256xf32> to vector<64xf32>
        %77 = vector.shape_cast %76 : vector<64xf32> to vector<64x1xf32>
        %c6_i32 = arith.constant 6 : i32
        %78 = vector.shape_cast %77 : vector<64x1xf32> to vector<1x64x1xf32>
        %79 = vector.broadcast %78 : vector<1x64x1xf32> to vector<1x64x256xf32>
        %80 = arith.cmpf olt, %28, %79 : vector<1x64x256xf32>
        %81 = vector.broadcast %cst_23 : f32 to vector<1x64x256xf32>
        %82 = arith.select %80, %28, %81 : vector<1x64x256xi1>, vector<1x64x256xf32>
        %cst_38 = arith.constant dense<0xFF800000> : vector<64x256xf32>
        %83 = vector.multi_reduction <maximumf>, %82, %cst_38 [0] : vector<1x64x256xf32> to vector<64x256xf32>
        %cst_39 = arith.constant dense<0xFF800000> : vector<64xf32>
        %84 = vector.multi_reduction <maximumf>, %83, %cst_39 [1] : vector<64x256xf32> to vector<64xf32>
        %85 = vector.shape_cast %84 : vector<64xf32> to vector<64x1xf32>
        %c7_i32 = arith.constant 7 : i32
        %86 = vector.shape_cast %85 : vector<64x1xf32> to vector<1x64x1xf32>
        %87 = vector.broadcast %86 : vector<1x64x1xf32> to vector<1x64x256xf32>
        %88 = arith.cmpf olt, %28, %87 : vector<1x64x256xf32>
        %89 = vector.broadcast %cst_23 : f32 to vector<1x64x256xf32>
        %90 = arith.select %88, %28, %89 : vector<1x64x256xi1>, vector<1x64x256xf32>
        %cst_40 = arith.constant dense<0xFF800000> : vector<64x256xf32>
        %91 = vector.multi_reduction <maximumf>, %90, %cst_40 [0] : vector<1x64x256xf32> to vector<64x256xf32>
        %cst_41 = arith.constant dense<0xFF800000> : vector<64xf32>
        %92 = vector.multi_reduction <maximumf>, %91, %cst_41 [1] : vector<64x256xf32> to vector<64xf32>
        %93 = vector.shape_cast %92 : vector<64xf32> to vector<64x1xf32>
        %c0_42 = arith.constant 0 : index
        %c0_43 = arith.constant 0 : index
        %94 = vector.load %arg11[%c0_42, %c0_43] : memref<64x1xf32, #tpu.memory_space<vmem>>, vector<64x1xf32>
        tpu.vector_store %arg11[%c0_42, %c0_43], %93 {strides = array<i32>} : memref<64x1xf32, #tpu.memory_space<vmem>>, vector<64x1xf32>,
        %cst_44 = arith.constant 0.000000e+00 : f32
        %95 = vector.broadcast %cst_44 : f32 to vector<64x128xf32>
        %c0_45 = arith.constant 0 : index
        %c0_46 = arith.constant 0 : index
        %96 = vector.load %arg12[%c0_45, %c0_46] : memref<64x128xf32, #tpu.memory_space<vmem>>, vector<64x128xf32>
        tpu.vector_store %arg12[%c0_45, %c0_46], %95 {strides = array<i32>} : memref<64x128xf32, #tpu.memory_space<vmem>>, vector<64x128xf32>,
      } else {
      }
      %c0 = arith.constant 0 : index
      %c0_4 = arith.constant 0 : index
      %9 = vector.load %arg11[%c0, %c0_4] : memref<64x1xf32, #tpu.memory_space<vmem>>, vector<64x1xf32>
      %10 = arith.index_cast %arg2 : i32 to index
      %c0_5 = arith.constant 0 : index
      %c0_6 = arith.constant 0 : index
      %11 = vector.load %arg10[%10, %c0_5, %c0_6] : memref<1x64x256xf32, #tpu.memory_space<vmem>>, vector<1x64x256xf32>
      %12 = vector.shape_cast %11 : vector<1x64x256xf32> to vector<64x256xf32>
      %13 = vector.broadcast %9 : vector<64x1xf32> to vector<64x256xf32>
      %14 = arith.cmpf oge, %12, %13 : vector<64x256xf32>
      %cst = arith.constant 0.000000e+00 : f32
      %15 = vector.broadcast %cst : f32 to vector<64x256xf32>
      %16 = arith.maximumf %12, %15 : vector<64x256xf32>
      %cst_7 = arith.constant 0.000000e+00 : f32
      %17 = vector.broadcast %cst_7 : f32 to vector<64x256xf32>
      %18 = arith.select %14, %16, %17 : vector<64x256xi1>, vector<64x256xf32>
      %c0_8 = arith.constant 0 : index
      %c0_9 = arith.constant 0 : index
      %19 = vector.load %arg8[%c0_8, %c0_9] : memref<64x256xf32, #tpu.memory_space<vmem>>, vector<64x256xf32>
      tpu.vector_store %arg8[%c0_8, %c0_9], %18 {strides = array<i32>} : memref<64x256xf32, #tpu.memory_space<vmem>>, vector<64x256xf32>,
      %c0_10 = arith.constant 0 : index
      %c0_11 = arith.constant 0 : index
      %20 = vector.load %arg12[%c0_10, %c0_11] : memref<64x128xf32, #tpu.memory_space<vmem>>, vector<64x128xf32>
      %c0_12 = arith.constant 0 : index
      %c0_13 = arith.constant 0 : index
      %21 = vector.load %arg6[%c0_12, %c0_13] : memref<256x128xf32, #tpu.memory_space<vmem>>, vector<256x128xf32>
      %cst_14 = arith.constant dense<0.000000e+00> : vector<64x128xf32>
      %22 = tpu.matmul %18, %21, %cst_14 {dimension_numbers = #tpu.dot_dimension_numbers<[1], [0], [0], [1], [0, 0, 1, 1], [], []>} : vector<64x256xf32>, vector<256x128xf32>, vector<64x128xf32> -> vector<64x128xf32>
      %23 = arith.addf %20, %22 : vector<64x128xf32>
      %c0_15 = arith.constant 0 : index
      %c0_16 = arith.constant 0 : index
      %24 = vector.load %arg12[%c0_15, %c0_16] : memref<64x128xf32, #tpu.memory_space<vmem>>, vector<64x128xf32>
      tpu.vector_store %arg12[%c0_15, %c0_16], %23 {strides = array<i32>} : memref<64x128xf32, #tpu.memory_space<vmem>>, vector<64x128xf32>,
      %c0_i32_17 = arith.constant 0 : i32
      %25 = arith.cmpi eq, %arg2, %c0_i32_17 : i32
      %26 = arith.extui %25 : i1 to i32
      %c0_i32_18 = arith.constant 0 : i32
      %27 = arith.cmpi ne, %26, %c0_i32_18 : i32
      scf.if %27 {
        %c0_19 = arith.constant 0 : index
        %c0_20 = arith.constant 0 : index
        %28 = vector.load %arg12[%c0_19, %c0_20] : memref<64x128xf32, #tpu.memory_space<vmem>>, vector<64x128xf32>
        %c0_21 = arith.constant 0 : index
        %c0_22 = arith.constant 0 : index
        %29 = vector.load %arg7[%c0_21, %c0_22] : memref<1x128xf32, #tpu.memory_space<vmem>>, vector<1x128xf32>
        %30 = vector.broadcast %29 : vector<1x128xf32> to vector<64x128xf32>
        %31 = arith.addf %28, %30 : vector<64x128xf32>
        %c0_23 = arith.constant 0 : index
        %c0_24 = arith.constant 0 : index
        %32 = vector.load %arg3[%c0_23, %c0_24] : memref<64x128xf32, #tpu.memory_space<vmem>>, vector<64x128xf32>
        %33 = arith.subf %31, %32 : vector<64x128xf32>
        %34 = arith.mulf %33, %33 : vector<64x128xf32>
        %cst_25 = arith.constant dense<0.000000e+00> : vector<64xf32>
        %35 = vector.multi_reduction <add>, %34, %cst_25 [1] : vector<64x128xf32> to vector<64xf32>
        %36 = vector.shape_cast %35 : vector<64xf32> to vector<64x1xf32>
        %37 = vector.shape_cast %36 : vector<64x1xf32> to vector<64x1xf32>
        %38 = vector.broadcast %37 : vector<64x1xf32> to vector<64x128xf32>
        %c0_26 = arith.constant 0 : index
        %c0_27 = arith.constant 0 : index
        %39 = vector.load %arg9[%c0_26, %c0_27] : memref<64x128xf32, #tpu.memory_space<vmem>>, vector<64x128xf32>
        tpu.vector_store %arg9[%c0_26, %c0_27], %38 {strides = array<i32>} : memref<64x128xf32, #tpu.memory_space<vmem>>, vector<64x128xf32>,
      } else {
      }
    } else {
    }
    return
  }
  func.func @transform_0(%arg0: i32, %arg1: i32, %arg2: i32) -> (i32, i32) {
    %c0_i32 = arith.constant 0 : i32
    %c0_i32_0 = arith.constant 0 : i32
    return %arg0, %c0_i32 : i32, i32
  }
  func.func @transform_1(%arg0: i32, %arg1: i32, %arg2: i32) -> (i32, i32) {
    %c1_i32 = arith.constant 1 : i32
    %0 = arith.subi %c1_i32, %arg1 : i32
    %1 = arith.muli %arg2, %0 : i32
    %c0_i32 = arith.constant 0 : i32
    %c0_i32_0 = arith.constant 0 : i32
    return %c0_i32, %1 : i32, i32
  }
  func.func @transform_2(%arg0: i32, %arg1: i32, %arg2: i32) -> (i32, i32) {
    %c1_i32 = arith.constant 1 : i32
    %0 = arith.subi %c1_i32, %arg1 : i32
    %1 = arith.muli %arg2, %0 : i32
    %c0_i32 = arith.constant 0 : i32
    %c0_i32_0 = arith.constant 0 : i32
    return %c0_i32, %1 : i32, i32
  }
  func.func @transform_3(%arg0: i32, %arg1: i32, %arg2: i32) -> (i32, i32) {
    %0 = arith.muli %arg2, %arg1 : i32
    %c0_i32 = arith.constant 0 : i32
    %c0_i32_0 = arith.constant 0 : i32
    return %0, %c0_i32 : i32, i32
  }
  func.func @transform_4(%arg0: i32, %arg1: i32, %arg2: i32) -> (i32, i32) {
    %c0_i32 = arith.constant 0 : i32
    %c0_i32_0 = arith.constant 0 : i32
    %c0_i32_1 = arith.constant 0 : i32
    return %c0_i32, %c0_i32_0 : i32, i32
  }
  func.func @transform_5(%arg0: i32, %arg1: i32, %arg2: i32) -> (i32, i32) {
    %0 = arith.muli %arg2, %arg1 : i32
    %c0_i32 = arith.constant 0 : i32
    return %arg0, %0 : i32, i32
  }
  func.func @transform_6(%arg0: i32, %arg1: i32, %arg2: i32) -> (i32, i32) {
    %c0_i32 = arith.constant 0 : i32
    %c0_i32_0 = arith.constant 0 : i32
    return %arg0, %c0_i32 : i32, i32
  }
}

</mosaic_0001>

<llo_original>
// kernel: tpu_custom_call.1
$region0: #{tpu_custom_call.1}
  #allocation0 [shape = 'u32[]', space=smem, size = 0x4, offset = 0x4, fixed_abs, tag = 'smem constant byte address 0x4 - core index']
  #allocation1 [shape = 'u32[72,128]{1,0:T(1,128)}', space=vmem, size = 0x9000, scoped, tag = 'internal scratch']
  #allocation2 [shape = 'f32[1,64,256]{2,1,0:T(8,128)}', space=vmem, size = 0x10000, scoped, tag = 'scratch operand']
  #allocation3 [shape = 'f32[64,1]{1,0:T(8,128)}', space=vmem, size = 0x8000, scoped, tag = 'scratch operand']
  #allocation4 [shape = 'f32[64,128]{1,0:T(8,128)}', space=vmem, size = 0x8000, scoped, tag = 'scratch operand']
  %s0 = inlined_call_operand.hbm [shape: f32[64,128], index: 0, kind: input, shape index: {}]
  %s1 = inlined_call_operand.hbm [shape: f32[128,256], index: 1, kind: input, shape index: {}]
  %s2 = inlined_call_operand.hbm [shape: f32[1,256], index: 2, kind: input, shape index: {}]
  %s3 = inlined_call_operand.hbm [shape: f32[256,128], index: 3, kind: input, shape index: {}]
  %s4 = inlined_call_operand.vmem [shape: f32[1,128], index: 4, kind: input, shape index: {}]
  %s5 = inlined_call_operand.hbm [shape: f32[64,256], index: 5, kind: output, shape index: {0}]
  %s6 = inlined_call_operand.hbm [shape: f32[64,128], index: 6, kind: output, shape index: {1}]
  %7 = xla_tuple %s5, %s6
  %s8 = sld [smem:[#allocation0]]
  $region93: #{tpu_custom_call.1} parent=0
    _
  %s10 = ssub.s32 1, %s8
  %s11 = scalar_select 0, %s10, %s8
  $region1: #{tpu_custom_call.1} parent=0
    #allocation5 [shape = 'u8[32768]{0}', space=vmem, size = 0x8000, scoped, tag = 'input window, operand 0, single buffered']
    #allocation6 [shape = 's32[2]{0}', space=sflag, size = 0x8, scoped, tag = 'scoped memory for tpu_custom_call.1']
    #allocation7 [shape = 's32[2]{0}', space=sflag, size = 0x8, scoped, tag = 'scoped memory for tpu_custom_call.1']
    #allocation8 [shape = 'u8[131072]{0}', space=vmem, size = 0x20000, scoped, tag = 'input window, operand 1, single buffered']
    #allocation9 [shape = 's32[1]{0}', space=sflag, size = 0x4, scoped, tag = 'scoped memory for tpu_custom_call.1']
    #allocation10 [shape = 'u8[2048]{0}', space=vmem, size = 0x800, scoped, tag = 'input window, operand 2']
    #allocation11 [shape = 'u8[131072]{0}', space=vmem, size = 0x20000, scoped, tag = 'input window, operand 3, single buffered']
    #allocation12 [shape = 'u8[131072]{0}', space=vmem, size = 0x20000, scoped, tag = 'output window, operand 0']
    #allocation13 [shape = 'u8[32768]{0}', space=vmem, size = 0x8000, scoped, tag = 'output window, operand 1, single buffered']
    #allocation14 [shape = 's32[1]{0}', space=sflag, size = 0x4, scoped, tag = 'scoped memory for tpu_custom_call.1']
    %12 = vsyncpa [#allocation6], 0
    %13 = vsyncpa [#allocation9], 0
    %14 = vsyncpa [#allocation7], 0
    %s15 = scalar_lea.sflag [#allocation7], 1
    %16 = vsyncpa %s15, 0
    %17 = vsyncpa [#allocation14], 0
    loop: start=0, step=1, limit=4
    $region2: #{tpu_custom_call.1} parent=1 // loop_pre_header
      _
    $region3: #{tpu_custom_call.1} parent=1 // loop_header
      %s19 = sphi 0, %s23
      %p20 = scmp.ge.s32.totalorder %s19, 4
      %s26 = sphi 0, %s45
      %s27 = sphi 0, %s41
      %s28 = sphi 0, %s37
      %s29 = sphi 0, %s26
      %s30 = sphi 0, %s27
      %s31 = sphi 0, %s28
      %s32 = sphi 0, %s29
      %s33 = sphi 0, %s30
      %s34 = sphi 0, %s31
      %s48 = sphi 0, %s50
      %s51 = sphi 0, %s48
      %s52 = sphi 0, %s51
      %s68 = sphi 0, %s52
      %s78 = sphi 0, %s80
      %s81 = sphi 0, %s78
      %s82 = sphi 0, %s81
      %s98 = sphi 0, %s82
      %s108 = sphi 0, %s110
      %s111 = sphi 0, %s108
      %s112 = sphi 0, %s111
      %s128 = sphi 0, %s112
      %s136 = sphi 0, %s138
      %s139 = sphi 0, %s136
      %s140 = sphi 0, %s139
      %s156 = sphi 0, %s140
      %s160 = sphi 0, %s160
      %s162 = sphi 0, %s160
      %s163 = sphi 0, %s162
      %s177 = sphi 0, %s163
      %s187 = sphi 0, %s189
      %s190 = sphi 0, %s187
      %s191 = sphi 0, %s190
      %s207 = sphi 0, %s191
      %s213 = sphi 0, %s215
      %s216 = sphi 0, %s213
      %s217 = sphi 0, %s216
      %s233 = sphi 0, %s217
    $region4: #{tpu_custom_call.1} parent=1 // loop_header_branch
      %22 = sbr.rel (%p20) target = $region8
    $region5: #{tpu_custom_call.1} parent=1 // loop_body
      %s24 = ssub.s32 %s19, 1
      %s25 = ssub.s32 %s19, 2
      %s35 = sadd.s32 1, %s28
      %p36 = scmp.ge.s32.totalorder %s35, 1
      %s37 = scalar_select %p36, 0, %s35
      %s38 = sadd.s32 1, %s27
      %s39 = scalar_select %p36, %s38, %s27
      %p40 = scmp.ge.s32.totalorder %s39, 2
      %s41 = scalar_select %p40, 0, %s39
      %s42 = sadd.s32 1, %s26
      %s43 = scalar_select %p40, %s42, %s26
      %p44 = scmp.ge.s32.totalorder %s43, 1
      %s45 = scalar_select %p44, 0, %s43
      %s46 = ssub.s32 %s26, %s45
      %p47 = scmp.eq.s32.totalorder %s46, 0
      %s49 = sadd.s32 %s48, 1
      %s50 = scalar_select %p47, %s48, %s49
      %p53 = pneg %p47
      %p54 = scmp.eq.s32.totalorder %s19, 1
      %p55 = por %p53, %p54
      %p56 = scmp.ne.s32.totalorder %s48, %s51
      %p57 = scmp.eq.s32.totalorder %s19, 0
      %p58 = por %p56, %p57
      %p59 = scmp.ne.s32.totalorder %s48, %s51
      %p60 = scmp.eq.s32.totalorder %s24, 1
      %p61 = por %p59, %p60
      %p62 = scmp.ne.s32.totalorder %s51, %s52
      %p63 = scmp.eq.s32.totalorder %s24, 0
      %p64 = por %p62, %p63
      %p65 = scmp.ne.s32.totalorder %s51, %s52
      %p66 = scmp.eq.s32.totalorder %s25, 1
      %p67 = por %p65, %p66
      %p69 = scmp.ne.s32.totalorder %s52, %s68
      %p70 = scmp.eq.s32.totalorder %s25, 0
      %p71 = por %p69, %p70
      %s72 = ssub.s32 1, %s27
      %s73 = smul.u32 %s28, %s72
      %s74 = ssub.s32 1, %s41
      %s75 = smul.u32 %s37, %s74
      %s76 = ssub.s32 %s73, %s75
      %p77 = scmp.eq.s32.totalorder %s76, 0
      %s79 = sadd.s32 %s78, 1
      %s80 = scalar_select %p77, %s78, %s79
      %p83 = pneg %p77
      %p84 = scmp.eq.s32.totalorder %s19, 1
      %p85 = por %p83, %p84
      %p86 = scmp.ne.s32.totalorder %s78, %s81
      %p87 = scmp.eq.s32.totalorder %s19, 0
      %p88 = por %p86, %p87
      %p89 = scmp.ne.s32.totalorder %s78, %s81
      %p90 = scmp.eq.s32.totalorder %s24, 1
      %p91 = por %p89, %p90
      %p92 = scmp.ne.s32.totalorder %s81, %s82
      %p93 = scmp.eq.s32.totalorder %s24, 0
      %p94 = por %p92, %p93
      %p95 = scmp.ne.s32.totalorder %s81, %s82
      %p96 = scmp.eq.s32.totalorder %s25, 1
      %p97 = por %p95, %p96
      %p99 = scmp.ne.s32.totalorder %s82, %s98
      %p100 = scmp.eq.s32.totalorder %s25, 0
      %p101 = por %p99, %p100
      %s102 = ssub.s32 1, %s27
      %s103 = smul.u32 %s28, %s102
      %s104 = ssub.s32 1, %s41
      %s105 = smul.u32 %s37, %s104
      %s106 = ssub.s32 %s103, %s105
      %p107 = scmp.eq.s32.totalorder %s106, 0
      %s109 = sadd.s32 %s108, 1
      %s110 = scalar_select %p107, %s108, %s109
      %p113 = pneg %p107
      %p114 = scmp.eq.s32.totalorder %s19, 1
      %p115 = por %p113, %p114
      %p116 = scmp.ne.s32.totalorder %s108, %s111
      %p117 = scmp.eq.s32.totalorder %s19, 0
      %p118 = por %p116, %p117
      %p119 = scmp.ne.s32.totalorder %s108, %s111
      %p120 = scmp.eq.s32.totalorder %s24, 1
      %p121 = por %p119, %p120
      %p122 = scmp.ne.s32.totalorder %s111, %s112
      %p123 = scmp.eq.s32.totalorder %s24, 0
      %p124 = por %p122, %p123
      %p125 = scmp.ne.s32.totalorder %s111, %s112
      %p126 = scmp.eq.s32.totalorder %s25, 1
      %p127 = por %p125, %p126
      %p129 = scmp.ne.s32.totalorder %s112, %s128
      %p130 = scmp.eq.s32.totalorder %s25, 0
      %p131 = por %p129, %p130
      %s132 = smul.u32 %s28, %s27
      %s133 = smul.u32 %s37, %s41
      %s134 = ssub.s32 %s132, %s133
      %p135 = scmp.eq.s32.totalorder %s134, 0
      %s137 = sadd.s32 %s136, 1
      %s138 = scalar_select %p135, %s136, %s137
      %p141 = pneg %p135
      %p142 = scmp.eq.s32.totalorder %s19, 1
      %p143 = por %p141, %p142
      %p144 = scmp.ne.s32.totalorder %s136, %s139
      %p145 = scmp.eq.s32.totalorder %s19, 0
      %p146 = por %p144, %p145
      %p147 = scmp.ne.s32.totalorder %s136, %s139
      %p148 = scmp.eq.s32.totalorder %s24, 1
      %p149 = por %p147, %p148
      %p150 = scmp.ne.s32.totalorder %s139, %s140
      %p151 = scmp.eq.s32.totalorder %s24, 0
      %p152 = por %p150, %p151
      %p153 = scmp.ne.s32.totalorder %s139, %s140
      %p154 = scmp.eq.s32.totalorder %s25, 1
      %p155 = por %p153, %p154
      %p157 = scmp.ne.s32.totalorder %s140, %s156
      %p158 = scmp.eq.s32.totalorder %s25, 0
      %p159 = por %p157, %p158
      %s161 = sadd.s32 %s160, 1
      %p164 = scmp.eq.s32.totalorder %s19, 1
      %p165 = scmp.ne.s32.totalorder %s160, %s162
      %p166 = scmp.eq.s32.totalorder %s19, 0
      %p167 = por %p165, %p166
      %p168 = scmp.ne.s32.totalorder %s160, %s162
      %p169 = scmp.eq.s32.totalorder %s24, 1
      %p170 = por %p168, %p169
      %p171 = scmp.ne.s32.totalorder %s162, %s163
      %p172 = scmp.eq.s32.totalorder %s24, 0
      %p173 = por %p171, %p172
      %p174 = scmp.ne.s32.totalorder %s162, %s163
      %p175 = scmp.eq.s32.totalorder %s25, 1
      %p176 = por %p174, %p175
      %p178 = scmp.ne.s32.totalorder %s163, %s177
      %p179 = scmp.eq.s32.totalorder %s25, 0
      %p180 = por %p178, %p179
      %s181 = smul.u32 %s28, %s27
      %s182 = smul.u32 %s37, %s41
      %s183 = ssub.s32 %s26, %s45
      %s184 = ssub.s32 %s181, %s182
      %s185 = sor.u32 %s183, %s184
      %p186 = scmp.eq.s32.totalorder %s185, 0
      %s188 = sadd.s32 %s187, 1
      %s189 = scalar_select %p186, %s187, %s188
      %p192 = pneg %p186
      %p193 = scmp.eq.s32.totalorder %s19, 1
      %p194 = por %p192, %p193
      %p195 = scmp.ne.s32.totalorder %s187, %s190
      %p196 = scmp.eq.s32.totalorder %s19, 0
      %p197 = por %p195, %p196
      %p198 = scmp.ne.s32.totalorder %s187, %s190
      %p199 = scmp.eq.s32.totalorder %s24, 1
      %p200 = por %p198, %p199
      %p201 = scmp.ne.s32.totalorder %s190, %s191
      %p202 = scmp.eq.s32.totalorder %s24, 0
      %p203 = por %p201, %p202
      %p204 = scmp.ne.s32.totalorder %s190, %s191
      %p205 = scmp.eq.s32.totalorder %s25, 1
      %p206 = por %p204, %p205
      %p208 = scmp.ne.s32.totalorder %s191, %s207
      %p209 = scmp.eq.s32.totalorder %s25, 0
      %p210 = por %p208, %p209
      %s211 = ssub.s32 %s26, %s45
      %p212 = scmp.eq.s32.totalorder %s211, 0
      %s214 = sadd.s32 %s213, 1
      %s215 = scalar_select %p212, %s213, %s214
      %p218 = pneg %p212
      %p219 = scmp.eq.s32.totalorder %s19, 1
      %p220 = por %p218, %p219
      %p221 = scmp.ne.s32.totalorder %s213, %s216
      %p222 = scmp.eq.s32.totalorder %s19, 0
      %p223 = por %p221, %p222
      %p224 = scmp.ne.s32.totalorder %s213, %s216
      %p225 = scmp.eq.s32.totalorder %s24, 1
      %p226 = por %p224, %p225
      %p227 = scmp.ne.s32.totalorder %s216, %s217
      %p228 = scmp.eq.s32.totalorder %s24, 0
      %p229 = por %p227, %p228
      %p230 = scmp.ne.s32.totalorder %s216, %s217
      %p231 = scmp.eq.s32.totalorder %s25, 1
      %p232 = por %p230, %p231
      %p234 = scmp.ne.s32.totalorder %s217, %s233
      %p235 = scmp.eq.s32.totalorder %s25, 0
      %p236 = por %p234, %p235
      %p237 = scmp.le.s32.totalorder 1, %s19
      %p238 = scmp.lt.s32.totalorder %s19, 3
      %p239 = pnand %p237, %p238
      %p240 = pneg %p239
      // Predicated region
      $region9: #{tpu_custom_call.1} parent=5 // pred_check
        _
      $region10: #{tpu_custom_call.1} parent=5 // pred_check_branch
        %242 = sbr.rel (%p239) target = $region12
      $region11: #{tpu_custom_call.1} parent=5 // pred_region
        %s243 = ssub.s32 %s19, 1
        // Predicated region
        $region13: #{tpu_custom_call.1} parent=11 // pred_check
          %p244 = pneg %p64
        $region14: #{tpu_custom_call.1} parent=11 // pred_check_branch
          %246 = sbr.rel (%p244) target = $region16
        $region15: #{tpu_custom_call.1} parent=11 // pred_region
          %s247 = smul.u32 8, %s29
          %249 = vsyncadd [#allocation6], 0
          %s250 = smul.addr %s247, 8
          %s251 = scalar_lea.hbm %s0, %s250
          %s252 = sshll.u32 %s251, 4
          %s253 = int_to_ptr.hbm [resolvable:$true] %s252
          %s254 = sshll.u32 [#allocation5], 4
          %s255 = int_to_ptr.vmem [resolvable:$true] %s254
          %260 = dma.hbm_to_vmem [thread:$0]  %s253, 1024, %s255, [#allocation6], 128, 128, 8
        $region16: #{tpu_custom_call.1} parent=11 // pred_fallthru
          _
        // Predicated region
        $region17: #{tpu_custom_call.1} parent=11 // pred_check
          %p261 = pneg %p94
        $region18: #{tpu_custom_call.1} parent=11 // pred_check_branch
          %263 = sbr.rel (%p261) target = $region20
        $region19: #{tpu_custom_call.1} parent=11 // pred_region
          %s264 = ssub.s32 1, %s30
          %s265 = smul.u32 %s31, %s264
          %s266 = smul.u32 2, %s265
          %268 = vsyncadd [#allocation9], 0
          %s269 = smul.addr %s266, 8
          %s270 = scalar_lea.hbm %s1, %s269
          %s271 = sshll.u32 %s270, 4
          %s272 = int_to_ptr.hbm [resolvable:$true] %s271
          %s273 = sshll.u32 [#allocation8], 4
          %s274 = int_to_ptr.vmem [resolvable:$true] %s273
          %279 = dma.hbm_to_vmem [thread:$0]  %s272, 4096, %s274, [#allocation9], 256, 256, 16
        $region20: #{tpu_custom_call.1} parent=11 // pred_fallthru
          _
        // Predicated region
        $region21: #{tpu_custom_call.1} parent=11 // pred_check
          %p280 = pneg %p152
        $region22: #{tpu_custom_call.1} parent=11 // pred_check_branch
          %282 = sbr.rel (%p280) target = $region24
        $region23: #{tpu_custom_call.1} parent=11 // pred_region
          %s283 = smul.u32 %s31, %s30
          %s284 = smul.u32 32, %s283
          %286 = vsyncadd [#allocation9], 0
          %s287 = smul.addr %s284, 8
          %s288 = scalar_lea.hbm %s3, %s287
          %s289 = sshll.u32 %s288, 4
          %s290 = int_to_ptr.hbm [resolvable:$true] %s289
          %s291 = sshll.u32 [#allocation11], 4
          %s292 = int_to_ptr.vmem [resolvable:$true] %s291
          %297 = dma.hbm_to_vmem [thread:$0]  %s290, 4096, %s292, [#allocation9], 128, 128, 8
        $region24: #{tpu_custom_call.1} parent=11 // pred_fallthru
          _
        // Predicated region
        $region25: #{tpu_custom_call.1} parent=11 // pred_check
          %p298 = pneg %p173
        $region26: #{tpu_custom_call.1} parent=11 // pred_check_branch
          %300 = sbr.rel (%p298) target = $region28
        $region27: #{tpu_custom_call.1} parent=11 // pred_region
          _
        $region28: #{tpu_custom_call.1} parent=11 // pred_fallthru
          _
      $region12: #{tpu_custom_call.1} parent=5 // pred_fallthru
        _
      %p301 = scmp.lt.s32.totalorder %s19, 2
      // Predicated region
      $region29: #{tpu_custom_call.1} parent=5 // pred_check
        %p302 = pneg %p301
      $region30: #{tpu_custom_call.1} parent=5 // pred_check_branch
        %304 = sbr.rel (%p302) target = $region32
      $region31: #{tpu_custom_call.1} parent=5 // pred_region
        // Predicated region
        $region33: #{tpu_custom_call.1} parent=31 // pred_check
          %p305 = pneg %p118
        $region34: #{tpu_custom_call.1} parent=31 // pred_check_branch
          %307 = sbr.rel (%p305) target = $region36
        $region35: #{tpu_custom_call.1} parent=31 // pred_region
          %s308 = sand.u32 %s19, 1
          %s309 = scalar_lea.sflag [#allocation6], %s308
          %s310 = sand.u32 %s108, 1
          %s311 = smul.addr %s310, 2
          %s312 = scalar_lea.vmem [#allocation10], %s311
          %s313 = ssub.s32 1, %s27
          %s314 = smul.u32 %s28, %s313
          %s315 = smul.u32 2, %s314
          %317 = vsyncadd %s309, 0
          %s318 = scalar_lea.hbm %s2, %s315
          %s320 = sshll.u32 %s318, 4
          %s321 = int_to_ptr.hbm [resolvable:$true] %s320
          %s322 = sshll.u32 %s312, 4
          %s323 = int_to_ptr.vmem [resolvable:$true] %s322
          %325 = dma.hbm_to_vmem [thread:$0]  %s321, 32, %s323, %s309
        $region36: #{tpu_custom_call.1} parent=31 // pred_fallthru
          _
      $region32: #{tpu_custom_call.1} parent=5 // pred_fallthru
        _
      %p326 = scmp.le.s32.totalorder 1, %s19
      %p327 = scmp.lt.s32.totalorder %s19, 3
      %p328 = pnand %p326, %p327
      %p329 = pneg %p328
      // Predicated region
      $region37: #{tpu_custom_call.1} parent=5 // pred_check
        _
      $region38: #{tpu_custom_call.1} parent=5 // pred_check_branch
        %331 = sbr.rel (%p328) target = $region40
      $region39: #{tpu_custom_call.1} parent=5 // pred_region
        %s332 = ssub.s32 %s19, 1
        // Predicated region
        $region41: #{tpu_custom_call.1} parent=39 // pred_check
          %p333 = pneg %p64
        $region42: #{tpu_custom_call.1} parent=39 // pred_check_branch
          %335 = sbr.rel (%p333) target = $region44
        $region43: #{tpu_custom_call.1} parent=39 // pred_region
          %337 = dma.done [#allocation6], 1024
        $region44: #{tpu_custom_call.1} parent=39 // pred_fallthru
          _
        // Predicated region
        $region45: #{tpu_custom_call.1} parent=39 // pred_check
          %p338 = pneg %p94
        $region46: #{tpu_custom_call.1} parent=39 // pred_check_branch
          %340 = sbr.rel (%p338) target = $region48
        $region47: #{tpu_custom_call.1} parent=39 // pred_region
          %342 = dma.done [#allocation9], 4096
        $region48: #{tpu_custom_call.1} parent=39 // pred_fallthru
          _
        %s343 = sand.u32 %s24, 1
        %s344 = scalar_lea.sflag [#allocation6], %s343
        %s345 = sand.u32 %s111, 1
        %s346 = smul.addr %s345, 2
        %s347 = scalar_lea.vmem [#allocation10], %s346
        // Predicated region
        $region49: #{tpu_custom_call.1} parent=39 // pred_check
          %p348 = pneg %p124
        $region50: #{tpu_custom_call.1} parent=39 // pred_check_branch
          %350 = sbr.rel (%p348) target = $region52
        $region51: #{tpu_custom_call.1} parent=39 // pred_region
          %352 = dma.done %s344, 32
        $region52: #{tpu_custom_call.1} parent=39 // pred_fallthru
          _
        // Predicated region
        $region53: #{tpu_custom_call.1} parent=39 // pred_check
          %p353 = pneg %p152
        $region54: #{tpu_custom_call.1} parent=39 // pred_check_branch
          %355 = sbr.rel (%p353) target = $region56
        $region55: #{tpu_custom_call.1} parent=39 // pred_region
          %357 = dma.done [#allocation9], 4096
        $region56: #{tpu_custom_call.1} parent=39 // pred_fallthru
          _
        %p358 = pneg %p64
        %p359 = pneg %p61
        %p360 = pneg %p94
        %p361 = pneg %p91
        %s362 = sand.u32 %s24, 1
        %s363 = scalar_lea.sflag [#allocation6], %s362
        %s364 = sand.u32 %s111, 1
        %s365 = smul.addr %s364, 2
        %s366 = scalar_lea.vmem [#allocation10], %s365
        %p367 = pneg %p124
        %p368 = pneg %p121
        %p369 = pneg %p152
        %p370 = pneg %p149
        %p371 = pneg %p173
        %p372 = pneg %p170
        %p373 = pneg %p203
        %p374 = pneg %p200
        %s375 = sand.u32 %s190, 1
        %s376 = scalar_lea.sflag [#allocation7], %s375
        %s377 = sand.u32 %s190, 1
        %s378 = smul.addr %s377, 128
        %s379 = scalar_lea.vmem [#allocation12], %s378
        %p380 = pneg %p229
        %p381 = pneg %p226
        %s382 = smul.u32 8, %s29
        %s383 = ssub.s32 1, %s30
        %s384 = smul.u32 %s31, %s383
        %s385 = smul.u32 2, %s384
        %s386 = ssub.s32 1, %s30
        %s387 = smul.u32 %s31, %s386
        %s388 = smul.u32 2, %s387
        %s389 = smul.u32 %s31, %s30
        %s390 = smul.u32 32, %s389
        %s391 = smul.u32 %s31, %s30
        %s392 = smul.u32 8, %s29
        %s393 = smul.u32 2, %s391
        %s394 = smul.u32 8, %s29
        %p395 = scmp.eq.s32.totalorder %s30, 0
        // Predicated region
        $region57: #{tpu_custom_call.1} parent=39 // pred_check
          %p396 = pneg %p395
        $region58: #{tpu_custom_call.1} parent=39 // pred_check_branch
          %398 = sbr.rel (%p396) target = $region60
        $region59: #{tpu_custom_call.1} parent=39 // pred_region
          %v399 = vld [vmem:[#allocation5] sm:$0xff]
          %v400 = vld [vmem:[#allocation5 + $0x8] sm:$0xff]
          %v401 = vld [vmem:[#allocation5 + $0x10] sm:$0xff]
          %v402 = vld [vmem:[#allocation5 + $0x18] sm:$0xff]
          %v403 = vld [vmem:[#allocation5 + $0x20] sm:$0xff]
          %v404 = vld [vmem:[#allocation5 + $0x28] sm:$0xff]
          %v405 = vld [vmem:[#allocation5 + $0x30] sm:$0xff]
          %v406 = vld [vmem:[#allocation5 + $0x38] sm:$0xff]
          %v407 = vld [vmem:[#allocation8] sm:$0xff]
          %v408 = vld [vmem:[#allocation8 + $0x8] sm:$0xff]
          %v409 = vld [vmem:[#allocation8 + $0x10] sm:$0xff]
          %v410 = vld [vmem:[#allocation8 + $0x18] sm:$0xff]
          %v411 = vld [vmem:[#allocation8 + $0x20] sm:$0xff]
          %v412 = vld [vmem:[#allocation8 + $0x28] sm:$0xff]
          %v413 = vld [vmem:[#allocation8 + $0x30] sm:$0xff]
          %v414 = vld [vmem:[#allocation8 + $0x38] sm:$0xff]
          %v415 = vld [vmem:[#allocation8 + $0x40] sm:$0xff]
          %v416 = vld [vmem:[#allocation8 + $0x48] sm:$0xff]
          %v417 = vld [vmem:[#allocation8 + $0x50] sm:$0xff]
          %v418 = vld [vmem:[#allocation8 + $0x58] sm:$0xff]
          %v419 = vld [vmem:[#allocation8 + $0x60] sm:$0xff]
          %v420 = vld [vmem:[#allocation8 + $0x68] sm:$0xff]
          %v421 = vld [vmem:[#allocation8 + $0x70] sm:$0xff]
          %v422 = vld [vmem:[#allocation8 + $0x78] sm:$0xff]
          %v423 = vld [vmem:[#allocation8 + $0x80] sm:$0xff]
          %v424 = vld [vmem:[#allocation8 + $0x88] sm:$0xff]
          %v425 = vld [vmem:[#allocation8 + $0x90] sm:$0xff]
          %v426 = vld [vmem:[#allocation8 + $0x98] sm:$0xff]
          %v427 = vld [vmem:[#allocation8 + $0xa0] sm:$0xff]
          %v428 = vld [vmem:[#allocation8 + $0xa8] sm:$0xff]
          %v429 = vld [vmem:[#allocation8 + $0xb0] sm:$0xff]
          %v430 = vld [vmem:[#allocation8 + $0xb8] sm:$0xff]
          %v431 = vld [vmem:[#allocation8 + $0xc0] sm:$0xff]
          %v432 = vld [vmem:[#allocation8 + $0xc8] sm:$0xff]
          %v433 = vld [vmem:[#allocation8 + $0xd0] sm:$0xff]
          %v434 = vld [vmem:[#allocation8 + $0xd8] sm:$0xff]
          %v435 = vld [vmem:[#allocation8 + $0xe0] sm:$0xff]
          %v436 = vld [vmem:[#allocation8 + $0xe8] sm:$0xff]
          %v437 = vld [vmem:[#allocation8 + $0xf0] sm:$0xff]
          %v438 = vld [vmem:[#allocation8 + $0xf8] sm:$0xff]
          %v439 = vld [vmem:[%s347] sm:$0x3]
          %v441 = vperm.slane %v439, 0
          %v442 = vperm.slane %v439, 1
          %445 = vmatpush.msra.mxu0 %v437
          %446 = vmatpush.msra.mxu0 %v435
          %447 = vmatpush.msra.mxu0 %v433
          %448 = vmatpush.msra.mxu0 %v431
          %449 = vmatpush.msra.mxu0 %v429
          %450 = vmatpush.msra.mxu0 %v427
          %451 = vmatpush.msra.mxu0 %v425
          %452 = vmatpush.msra.mxu0 %v423
          %453 = vmatpush.msra.mxu0 %v421
          %454 = vmatpush.msra.mxu0 %v419
          %455 = vmatpush.msra.mxu0 %v417
          %456 = vmatpush.msra.mxu0 %v415
          %457 = vmatpush.msra.mxu0 %v413
          %458 = vmatpush.msra.mxu0 %v411
          %459 = vmatpush.msra.mxu0 %v409
          %460 = vmatpush.msra.mxu0 %v407
          %461 = vmatmul.f32.gmra.mxu0 %v399
          %v462 = vpop.f32.mrf.mxu0
          %v463 = vadd.f32 %v441, %v462
          %464 = vmatmul.f32.gmra.mxu0 %v400
          %v465 = vpop.f32.mrf.mxu0
          %v466 = vadd.f32 %v441, %v465
          %467 = vmatmul.f32.gmra.mxu0 %v401
          %v468 = vpop.f32.mrf.mxu0
          %v469 = vadd.f32 %v441, %v468
          %470 = vmatmul.f32.gmra.mxu0 %v402
          %v471 = vpop.f32.mrf.mxu0
          %v472 = vadd.f32 %v441, %v471
          %473 = vmatmul.f32.gmra.mxu0 %v403
          %v474 = vpop.f32.mrf.mxu0
          %v475 = vadd.f32 %v441, %v474
          %476 = vmatmul.f32.gmra.mxu0 %v404
          %v477 = vpop.f32.mrf.mxu0
          %v478 = vadd.f32 %v441, %v477
          %479 = vmatmul.f32.gmra.mxu0 %v405
          %v480 = vpop.f32.mrf.mxu0
          %v481 = vadd.f32 %v441, %v480
          %482 = vmatmul.f32.gmra.mxu0 %v406
          %v483 = vpop.f32.mrf.mxu0
          %v484 = vadd.f32 %v441, %v483
          %485 = vdwg.mxu0
          %486 = vmatpush.msra.mxu0 %v438
          %487 = vmatpush.msra.mxu0 %v436
          %488 = vmatpush.msra.mxu0 %v434
          %489 = vmatpush.msra.mxu0 %v432
          %490 = vmatpush.msra.mxu0 %v430
          %491 = vmatpush.msra.mxu0 %v428
          %492 = vmatpush.msra.mxu0 %v426
          %493 = vmatpush.msra.mxu0 %v424
          %494 = vmatpush.msra.mxu0 %v422
          %495 = vmatpush.msra.mxu0 %v420
          %496 = vmatpush.msra.mxu0 %v418
          %497 = vmatpush.msra.mxu0 %v416
          %498 = vmatpush.msra.mxu0 %v414
          %499 = vmatpush.msra.mxu0 %v412
          %500 = vmatpush.msra.mxu0 %v410
          %501 = vmatpush.msra.mxu0 %v408
          %502 = vmatmul.f32.gmra.mxu0 %v399
          %v503 = vpop.f32.mrf.mxu0
          %v504 = vadd.f32 %v442, %v503
          %505 = vmatmul.f32.gmra.mxu0 %v400
          %v506 = vpop.f32.mrf.mxu0
          %v507 = vadd.f32 %v442, %v506
          %508 = vmatmul.f32.gmra.mxu0 %v401
          %v509 = vpop.f32.mrf.mxu0
          %v510 = vadd.f32 %v442, %v509
          %511 = vmatmul.f32.gmra.mxu0 %v402
          %v512 = vpop.f32.mrf.mxu0
          %v513 = vadd.f32 %v442, %v512
          %514 = vmatmul.f32.gmra.mxu0 %v403
          %v515 = vpop.f32.mrf.mxu0
          %v516 = vadd.f32 %v442, %v515
          %517 = vmatmul.f32.gmra.mxu0 %v404
          %v518 = vpop.f32.mrf.mxu0
          %v519 = vadd.f32 %v442, %v518
          %520 = vmatmul.f32.gmra.mxu0 %v405
          %v521 = vpop.f32.mrf.mxu0
          %v522 = vadd.f32 %v442, %v521
          %523 = vmatmul.f32.gmra.mxu0 %v406
          %v524 = vpop.f32.mrf.mxu0
          %v525 = vadd.f32 %v442, %v524
          %526 = vdwg.mxu0
          %s527 = smul.u32 %s31, 16
          %s528 = smul.addr %s527, 8
          %s529 = scalar_lea.vmem [#allocation2], %s528
          %530 = vst [vmem:[%s529] sm:$0xff] %v463
          %531 = vst [vmem:[%s529 + $0x8] sm:$0xff] %v504
          %532 = vst [vmem:[%s529 + $0x10] sm:$0xff] %v466
          %533 = vst [vmem:[%s529 + $0x18] sm:$0xff] %v507
          %534 = vst [vmem:[%s529 + $0x20] sm:$0xff] %v469
          %535 = vst [vmem:[%s529 + $0x28] sm:$0xff] %v510
          %536 = vst [vmem:[%s529 + $0x30] sm:$0xff] %v472
          %537 = vst [vmem:[%s529 + $0x38] sm:$0xff] %v513
          %538 = vst [vmem:[%s529 + $0x40] sm:$0xff] %v475
          %539 = vst [vmem:[%s529 + $0x48] sm:$0xff] %v516
          %540 = vst [vmem:[%s529 + $0x50] sm:$0xff] %v478
          %541 = vst [vmem:[%s529 + $0x58] sm:$0xff] %v519
          %542 = vst [vmem:[%s529 + $0x60] sm:$0xff] %v481
          %543 = vst [vmem:[%s529 + $0x68] sm:$0xff] %v522
          %544 = vst [vmem:[%s529 + $0x70] sm:$0xff] %v484
          %545 = vst [vmem:[%s529 + $0x78] sm:$0xff] %v525
        $region60: #{tpu_custom_call.1} parent=39 // pred_fallthru
          _
        %p546 = scmp.eq.s32.totalorder %s30, 1
        // Predicated region
        $region61: #{tpu_custom_call.1} parent=39 // pred_check
          %p547 = pneg %p546
        $region62: #{tpu_custom_call.1} parent=39 // pred_check_branch
          %549 = sbr.rel (%p547) target = $region64
        $region63: #{tpu_custom_call.1} parent=39 // pred_region
          %p550 = scmp.eq.s32.totalorder %s31, 0
          // Predicated region
          $region65: #{tpu_custom_call.1} parent=63 // pred_check
            %p551 = pneg %p550
          $region66: #{tpu_custom_call.1} parent=63 // pred_check_branch
            %553 = sbr.rel (%p551) target = $region68
          $region67: #{tpu_custom_call.1} parent=63 // pred_region
            %v554 = vld [vmem:[#allocation2] sm:$0xff]
            %v555 = vld [vmem:[#allocation2 + $0x8] sm:$0xff]
            %v556 = vld [vmem:[#allocation2 + $0x10] sm:$0xff]
            %v557 = vld [vmem:[#allocation2 + $0x18] sm:$0xff]
            %v558 = vld [vmem:[#allocation2 + $0x20] sm:$0xff]
            %v559 = vld [vmem:[#allocation2 + $0x28] sm:$0xff]
            %v560 = vld [vmem:[#allocation2 + $0x30] sm:$0xff]
            %v561 = vld [vmem:[#allocation2 + $0x38] sm:$0xff]
            %v562 = vld [vmem:[#allocation2 + $0x40] sm:$0xff]
            %v563 = vld [vmem:[#allocation2 + $0x48] sm:$0xff]
            %v564 = vld [vmem:[#allocation2 + $0x50] sm:$0xff]
            %v565 = vld [vmem:[#allocation2 + $0x58] sm:$0xff]
            %v566 = vld [vmem:[#allocation2 + $0x60] sm:$0xff]
            %v567 = vld [vmem:[#allocation2 + $0x68] sm:$0xff]
            %v568 = vld [vmem:[#allocation2 + $0x70] sm:$0xff]
            %v569 = vld [vmem:[#allocation2 + $0x78] sm:$0xff]
            %vm570 = vcmp.lt.f32.partialorder %v554, inf
            %vm571 = vcmp.lt.f32.partialorder %v555, inf
            %vm572 = vcmp.lt.f32.partialorder %v556, inf
            %vm573 = vcmp.lt.f32.partialorder %v557, inf
            %vm574 = vcmp.lt.f32.partialorder %v558, inf
            %vm575 = vcmp.lt.f32.partialorder %v559, inf
            %vm576 = vcmp.lt.f32.partialorder %v560, inf
            %vm577 = vcmp.lt.f32.partialorder %v561, inf
            %vm578 = vcmp.lt.f32.partialorder %v562, inf
            %vm579 = vcmp.lt.f32.partialorder %v563, inf
            %vm580 = vcmp.lt.f32.partialorder %v564, inf
            %vm581 = vcmp.lt.f32.partialorder %v565, inf
            %vm582 = vcmp.lt.f32.partialorder %v566, inf
            %vm583 = vcmp.lt.f32.partialorder %v567, inf
            %vm584 = vcmp.lt.f32.partialorder %v568, inf
            %vm585 = vcmp.lt.f32.partialorder %v569, inf
            %v586 = vsel %vm570, %v554, -inf
            %v587 = vsel %vm571, %v555, -inf
            %v588 = vsel %vm572, %v556, -inf
            %v589 = vsel %vm573, %v557, -inf
            %v590 = vsel %vm574, %v558, -inf
            %v591 = vsel %vm575, %v559, -inf
            %v592 = vsel %vm576, %v560, -inf
            %v593 = vsel %vm577, %v561, -inf
            %v594 = vsel %vm578, %v562, -inf
            %v595 = vsel %vm579, %v563, -inf
            %v596 = vsel %vm580, %v564, -inf
            %v597 = vsel %vm581, %v565, -inf
            %v598 = vsel %vm582, %v566, -inf
            %v599 = vsel %vm583, %v567, -inf
            %v600 = vsel %vm584, %v568, -inf
            %v601 = vsel %vm585, %v569, -inf
            %v602 = vmax.f32 %v586, %v587
            %603 = vmax.xlane.f32.xlu0 %v602
            %v604 = vpop.xlane.xlu0 %603
            %v605 = vmax.f32 %v588, %v589
            %606 = vmax.xlane.f32.xlu0 %v605
            %v607 = vpop.xlane.xlu0 %606
            %v608 = vmax.f32 %v590, %v591
            %609 = vmax.xlane.f32.xlu0 %v608
            %v610 = vpop.xlane.xlu0 %609
            %v611 = vmax.f32 %v592, %v593
            %612 = vmax.xlane.f32.xlu0 %v611
            %v613 = vpop.xlane.xlu0 %612
            %v614 = vmax.f32 %v594, %v595
            %615 = vmax.xlane.f32.xlu0 %v614
            %v616 = vpop.xlane.xlu0 %615
            %v617 = vmax.f32 %v596, %v597
            %618 = vmax.xlane.f32.xlu0 %v617
            %v619 = vpop.xlane.xlu0 %618
            %v620 = vmax.f32 %v598, %v599
            %621 = vmax.xlane.f32.xlu0 %v620
            %v622 = vpop.xlane.xlu0 %621
            %v623 = vmax.f32 %v600, %v601
            %624 = vmax.xlane.f32.xlu0 %v623
            %v625 = vpop.xlane.xlu0 %624
            %vm626 = vcmp.lt.f32.partialorder %v554, %v604
            %vm627 = vcmp.lt.f32.partialorder %v555, %v604
            %vm628 = vcmp.lt.f32.partialorder %v556, %v607
            %vm629 = vcmp.lt.f32.partialorder %v557, %v607
            %vm630 = vcmp.lt.f32.partialorder %v558, %v610
            %vm631 = vcmp.lt.f32.partialorder %v559, %v610
            %vm632 = vcmp.lt.f32.partialorder %v560, %v613
            %vm633 = vcmp.lt.f32.partialorder %v561, %v613
            %vm634 = vcmp.lt.f32.partialorder %v562, %v616
            %vm635 = vcmp.lt.f32.partialorder %v563, %v616
            %vm636 = vcmp.lt.f32.partialorder %v564, %v619
            %vm637 = vcmp.lt.f32.partialorder %v565, %v619
            %vm638 = vcmp.lt.f32.partialorder %v566, %v622
            %vm639 = vcmp.lt.f32.partialorder %v567, %v622
            %vm640 = vcmp.lt.f32.partialorder %v568, %v625
            %vm641 = vcmp.lt.f32.partialorder %v569, %v625
            %v642 = vsel %vm626, %v554, -inf
            %v643 = vsel %vm627, %v555, -inf
            %v644 = vsel %vm628, %v556, -inf
            %v645 = vsel %vm629, %v557, -inf
            %v646 = vsel %vm630, %v558, -inf
            %v647 = vsel %vm631, %v559, -inf
            %v648 = vsel %vm632, %v560, -inf
            %v649 = vsel %vm633, %v561, -inf
            %v650 = vsel %vm634, %v562, -inf
            %v651 = vsel %vm635, %v563, -inf
            %v652 = vsel %vm636, %v564, -inf
            %v653 = vsel %vm637, %v565, -inf
            %v654 = vsel %vm638, %v566, -inf
            %v655 = vsel %vm639, %v567, -inf
            %v656 = vsel %vm640, %v568, -inf
            %v657 = vsel %vm641, %v569, -inf
            %v658 = vmax.f32 %v642, %v643
            %659 = vmax.xlane.f32.xlu0 %v658
            %v660 = vpop.xlane.xlu0 %659
            %v661 = vmax.f32 %v644, %v645
            %662 = vmax.xlane.f32.xlu0 %v661
            %v663 = vpop.xlane.xlu0 %662
            %v664 = vmax.f32 %v646, %v647
            %665 = vmax.xlane.f32.xlu0 %v664
            %v666 = vpop.xlane.xlu0 %665
            %v667 = vmax.f32 %v648, %v649
            %668 = vmax.xlane.f32.xlu0 %v667
            %v669 = vpop.xlane.xlu0 %668
            %v670 = vmax.f32 %v650, %v651
            %671 = vmax.xlane.f32.xlu0 %v670
            %v672 = vpop.xlane.xlu0 %671
            %v673 = vmax.f32 %v652, %v653
            %674 = vmax.xlane.f32.xlu0 %v673
            %v675 = vpop.xlane.xlu0 %674
            %v676 = vmax.f32 %v654, %v655
            %677 = vmax.xlane.f32.xlu0 %v676
            %v678 = vpop.xlane.xlu0 %677
            %v679 = vmax.f32 %v656, %v657
            %680 = vmax.xlane.f32.xlu0 %v679
            %v681 = vpop.xlane.xlu0 %680
            %vm682 = vcmp.lt.f32.partialorder %v554, %v660
            %vm683 = vcmp.lt.f32.partialorder %v555, %v660
            %vm684 = vcmp.lt.f32.partialorder %v556, %v663
            %vm685 = vcmp.lt.f32.partialorder %v557, %v663
            %vm686 = vcmp.lt.f32.partialorder %v558, %v666
            %vm687 = vcmp.lt.f32.partialorder %v559, %v666
            %vm688 = vcmp.lt.f32.partialorder %v560, %v669
            %vm689 = vcmp.lt.f32.partialorder %v561, %v669
            %vm690 = vcmp.lt.f32.partialorder %v562, %v672
            %vm691 = vcmp.lt.f32.partialorder %v563, %v672
            %vm692 = vcmp.lt.f32.partialorder %v564, %v675
            %vm693 = vcmp.lt.f32.partialorder %v565, %v675
            %vm694 = vcmp.lt.f32.partialorder %v566, %v678
            %vm695 = vcmp.lt.f32.partialorder %v567, %v678
            %vm696 = vcmp.lt.f32.partialorder %v568, %v681
            %vm697 = vcmp.lt.f32.partialorder %v569, %v681
            %v698 = vsel %vm682, %v554, -inf
            %v699 = vsel %vm683, %v555, -inf
            %v700 = vsel %vm684, %v556, -inf
            %v701 = vsel %vm685, %v557, -inf
            %v702 = vsel %vm686, %v558, -inf
            %v703 = vsel %vm687, %v559, -inf
            %v704 = vsel %vm688, %v560, -inf
            %v705 = vsel %vm689, %v561, -inf
            %v706 = vsel %vm690, %v562, -inf
            %v707 = vsel %vm691, %v563, -inf
            %v708 = vsel %vm692, %v564, -inf
            %v709 = vsel %vm693, %v565, -inf
            %v710 = vsel %vm694, %v566, -inf
            %v711 = vsel %vm695, %v567, -inf
            %v712 = vsel %vm696, %v568, -inf
            %v713 = vsel %vm697, %v569, -inf
            %v714 = vmax.f32 %v698, %v699
            %715 = vmax.xlane.f32.xlu0 %v714
            %v716 = vpop.xlane.xlu0 %715
            %v717 = vmax.f32 %v700, %v701
            %718 = vmax.xlane.f32.xlu0 %v717
            %v719 = vpop.xlane.xlu0 %718
            %v720 = vmax.f32 %v702, %v703
            %721 = vmax.xlane.f32.xlu0 %v720
            %v722 = vpop.xlane.xlu0 %721
            %v723 = vmax.f32 %v704, %v705
            %724 = vmax.xlane.f32.xlu0 %v723
            %v725 = vpop.xlane.xlu0 %724
            %v726 = vmax.f32 %v706, %v707
            %727 = vmax.xlane.f32.xlu0 %v726
            %v728 = vpop.xlane.xlu0 %727
            %v729 = vmax.f32 %v708, %v709
            %730 = vmax.xlane.f32.xlu0 %v729
            %v731 = vpop.xlane.xlu0 %730
            %v732 = vmax.f32 %v710, %v711
            %733 = vmax.xlane.f32.xlu0 %v732
            %v734 = vpop.xlane.xlu0 %733
            %v735 = vmax.f32 %v712, %v713
            %736 = vmax.xlane.f32.xlu0 %v735
            %v737 = vpop.xlane.xlu0 %736
            %vm738 = vcmp.lt.f32.partialorder %v554, %v716
            %vm739 = vcmp.lt.f32.partialorder %v555, %v716
            %vm740 = vcmp.lt.f32.partialorder %v556, %v719
            %vm741 = vcmp.lt.f32.partialorder %v557, %v719
            %vm742 = vcmp.lt.f32.partialorder %v558, %v722
            %vm743 = vcmp.lt.f32.partialorder %v559, %v722
            %vm744 = vcmp.lt.f32.partialorder %v560, %v725
            %vm745 = vcmp.lt.f32.partialorder %v561, %v725
            %vm746 = vcmp.lt.f32.partialorder %v562, %v728
            %vm747 = vcmp.lt.f32.partialorder %v563, %v728
            %vm748 = vcmp.lt.f32.partialorder %v564, %v731
            %vm749 = vcmp.lt.f32.partialorder %v565, %v731
            %vm750 = vcmp.lt.f32.partialorder %v566, %v734
            %vm751 = vcmp.lt.f32.partialorder %v567, %v734
            %vm752 = vcmp.lt.f32.partialorder %v568, %v737
            %vm753 = vcmp.lt.f32.partialorder %v569, %v737
            %v754 = vsel %vm738, %v554, -inf
            %v755 = vsel %vm739, %v555, -inf
            %v756 = vsel %vm740, %v556, -inf
            %v757 = vsel %vm741, %v557, -inf
            %v758 = vsel %vm742, %v558, -inf
            %v759 = vsel %vm743, %v559, -inf
            %v760 = vsel %vm744, %v560, -inf
            %v761 = vsel %vm745, %v561, -inf
            %v762 = vsel %vm746, %v562, -inf
            %v763 = vsel %vm747, %v563, -inf
            %v764 = vsel %vm748, %v564, -inf
            %v765 = vsel %vm749, %v565, -inf
            %v766 = vsel %vm750, %v566, -inf
            %v767 = vsel %vm751, %v567, -inf
            %v768 = vsel %vm752, %v568, -inf
            %v769 = vsel %vm753, %v569, -inf
            %v770 = vmax.f32 %v754, %v755
            %771 = vmax.xlane.f32.xlu0 %v770
            %v772 = vpop.xlane.xlu0 %771
            %v773 = vmax.f32 %v756, %v757
            %774 = vmax.xlane.f32.xlu0 %v773
            %v775 = vpop.xlane.xlu0 %774
            %v776 = vmax.f32 %v758, %v759
            %777 = vmax.xlane.f32.xlu0 %v776
            %v778 = vpop.xlane.xlu0 %777
            %v779 = vmax.f32 %v760, %v761
            %780 = vmax.xlane.f32.xlu0 %v779
            %v781 = vpop.xlane.xlu0 %780
            %v782 = vmax.f32 %v762, %v763
            %783 = vmax.xlane.f32.xlu0 %v782
            %v784 = vpop.xlane.xlu0 %783
            %v785 = vmax.f32 %v764, %v765
            %786 = vmax.xlane.f32.xlu0 %v785
            %v787 = vpop.xlane.xlu0 %786
            %v788 = vmax.f32 %v766, %v767
            %789 = vmax.xlane.f32.xlu0 %v788
            %v790 = vpop.xlane.xlu0 %789
            %v791 = vmax.f32 %v768, %v769
            %792 = vmax.xlane.f32.xlu0 %v791
            %v793 = vpop.xlane.xlu0 %792
            %vm794 = vcmp.lt.f32.partialorder %v554, %v772
            %vm795 = vcmp.lt.f32.partialorder %v555, %v772
            %vm796 = vcmp.lt.f32.partialorder %v556, %v775
            %vm797 = vcmp.lt.f32.partialorder %v557, %v775
            %vm798 = vcmp.lt.f32.partialorder %v558, %v778
            %vm799 = vcmp.lt.f32.partialorder %v559, %v778
            %vm800 = vcmp.lt.f32.partialorder %v560, %v781
            %vm801 = vcmp.lt.f32.partialorder %v561, %v781
            %vm802 = vcmp.lt.f32.partialorder %v562, %v784
            %vm803 = vcmp.lt.f32.partialorder %v563, %v784
            %vm804 = vcmp.lt.f32.partialorder %v564, %v787
            %vm805 = vcmp.lt.f32.partialorder %v565, %v787
            %vm806 = vcmp.lt.f32.partialorder %v566, %v790
            %vm807 = vcmp.lt.f32.partialorder %v567, %v790
            %vm808 = vcmp.lt.f32.partialorder %v568, %v793
            %vm809 = vcmp.lt.f32.partialorder %v569, %v793
            %v810 = vsel %vm794, %v554, -inf
            %v811 = vsel %vm795, %v555, -inf
            %v812 = vsel %vm796, %v556, -inf
            %v813 = vsel %vm797, %v557, -inf
            %v814 = vsel %vm798, %v558, -inf
            %v815 = vsel %vm799, %v559, -inf
            %v816 = vsel %vm800, %v560, -inf
            %v817 = vsel %vm801, %v561, -inf
            %v818 = vsel %vm802, %v562, -inf
            %v819 = vsel %vm803, %v563, -inf
            %v820 = vsel %vm804, %v564, -inf
            %v821 = vsel %vm805, %v565, -inf
            %v822 = vsel %vm806, %v566, -inf
            %v823 = vsel %vm807, %v567, -inf
            %v824 = vsel %vm808, %v568, -inf
            %v825 = vsel %vm809, %v569, -inf
            %v826 = vmax.f32 %v810, %v811
            %827 = vmax.xlane.f32.xlu0 %v826
            %v828 = vpop.xlane.xlu0 %827
            %v829 = vmax.f32 %v812, %v813
            %830 = vmax.xlane.f32.xlu0 %v829
            %v831 = vpop.xlane.xlu0 %830
            %v832 = vmax.f32 %v814, %v815
            %833 = vmax.xlane.f32.xlu0 %v832
            %v834 = vpop.xlane.xlu0 %833
            %v835 = vmax.f32 %v816, %v817
            %836 = vmax.xlane.f32.xlu0 %v835
            %v837 = vpop.xlane.xlu0 %836
            %v838 = vmax.f32 %v818, %v819
            %839 = vmax.xlane.f32.xlu0 %v838
            %v840 = vpop.xlane.xlu0 %839
            %v841 = vmax.f32 %v820, %v821
            %842 = vmax.xlane.f32.xlu0 %v841
            %v843 = vpop.xlane.xlu0 %842
            %v844 = vmax.f32 %v822, %v823
            %845 = vmax.xlane.f32.xlu0 %v844
            %v846 = vpop.xlane.xlu0 %845
            %v847 = vmax.f32 %v824, %v825
            %848 = vmax.xlane.f32.xlu0 %v847
            %v849 = vpop.xlane.xlu0 %848
            %vm850 = vcmp.lt.f32.partialorder %v554, %v828
            %vm851 = vcmp.lt.f32.partialorder %v555, %v828
            %vm852 = vcmp.lt.f32.partialorder %v556, %v831
            %vm853 = vcmp.lt.f32.partialorder %v557, %v831
            %vm854 = vcmp.lt.f32.partialorder %v558, %v834
            %vm855 = vcmp.lt.f32.partialorder %v559, %v834
            %vm856 = vcmp.lt.f32.partialorder %v560, %v837
            %vm857 = vcmp.lt.f32.partialorder %v561, %v837
            %vm858 = vcmp.lt.f32.partialorder %v562, %v840
            %vm859 = vcmp.lt.f32.partialorder %v563, %v840
            %vm860 = vcmp.lt.f32.partialorder %v564, %v843
            %vm861 = vcmp.lt.f32.partialorder %v565, %v843
            %vm862 = vcmp.lt.f32.partialorder %v566, %v846
            %vm863 = vcmp.lt.f32.partialorder %v567, %v846
            %vm864 = vcmp.lt.f32.partialorder %v568, %v849
            %vm865 = vcmp.lt.f32.partialorder %v569, %v849
            %v866 = vsel %vm850, %v554, -inf
            %v867 = vsel %vm851, %v555, -inf
            %v868 = vsel %vm852, %v556, -inf
            %v869 = vsel %vm853, %v557, -inf
            %v870 = vsel %vm854, %v558, -inf
            %v871 = vsel %vm855, %v559, -inf
            %v872 = vsel %vm856, %v560, -inf
            %v873 = vsel %vm857, %v561, -inf
            %v874 = vsel %vm858, %v562, -inf
            %v875 = vsel %vm859, %v563, -inf
            %v876 = vsel %vm860, %v564, -inf
            %v877 = vsel %vm861, %v565, -inf
            %v878 = vsel %vm862, %v566, -inf
            %v879 = vsel %vm863, %v567, -inf
            %v880 = vsel %vm864, %v568, -inf
            %v881 = vsel %vm865, %v569, -inf
            %v882 = vmax.f32 %v866, %v867
            %883 = vmax.xlane.f32.xlu0 %v882
            %v884 = vpop.xlane.xlu0 %883
            %v885 = vmax.f32 %v868, %v869
            %886 = vmax.xlane.f32.xlu0 %v885
            %v887 = vpop.xlane.xlu0 %886
            %v888 = vmax.f32 %v870, %v871
            %889 = vmax.xlane.f32.xlu0 %v888
            %v890 = vpop.xlane.xlu0 %889
            %v891 = vmax.f32 %v872, %v873
            %892 = vmax.xlane.f32.xlu0 %v891
            %v893 = vpop.xlane.xlu0 %892
            %v894 = vmax.f32 %v874, %v875
            %895 = vmax.xlane.f32.xlu0 %v894
            %v896 = vpop.xlane.xlu0 %895
            %v897 = vmax.f32 %v876, %v877
            %898 = vmax.xlane.f32.xlu0 %v897
            %v899 = vpop.xlane.xlu0 %898
            %v900 = vmax.f32 %v878, %v879
            %901 = vmax.xlane.f32.xlu0 %v900
            %v902 = vpop.xlane.xlu0 %901
            %v903 = vmax.f32 %v880, %v881
            %904 = vmax.xlane.f32.xlu0 %v903
            %v905 = vpop.xlane.xlu0 %904
            %vm906 = vcmp.lt.f32.partialorder %v554, %v884
            %vm907 = vcmp.lt.f32.partialorder %v555, %v884
            %vm908 = vcmp.lt.f32.partialorder %v556, %v887
            %vm909 = vcmp.lt.f32.partialorder %v557, %v887
            %vm910 = vcmp.lt.f32.partialorder %v558, %v890
            %vm911 = vcmp.lt.f32.partialorder %v559, %v890
            %vm912 = vcmp.lt.f32.partialorder %v560, %v893
            %vm913 = vcmp.lt.f32.partialorder %v561, %v893
            %vm914 = vcmp.lt.f32.partialorder %v562, %v896
            %vm915 = vcmp.lt.f32.partialorder %v563, %v896
            %vm916 = vcmp.lt.f32.partialorder %v564, %v899
            %vm917 = vcmp.lt.f32.partialorder %v565, %v899
            %vm918 = vcmp.lt.f32.partialorder %v566, %v902
            %vm919 = vcmp.lt.f32.partialorder %v567, %v902
            %vm920 = vcmp.lt.f32.partialorder %v568, %v905
            %vm921 = vcmp.lt.f32.partialorder %v569, %v905
            %v922 = vsel %vm906, %v554, -inf
            %v923 = vsel %vm907, %v555, -inf
            %v924 = vsel %vm908, %v556, -inf
            %v925 = vsel %vm909, %v557, -inf
            %v926 = vsel %vm910, %v558, -inf
            %v927 = vsel %vm911, %v559, -inf
            %v928 = vsel %vm912, %v560, -inf
            %v929 = vsel %vm913, %v561, -inf
            %v930 = vsel %vm914, %v562, -inf
            %v931 = vsel %vm915, %v563, -inf
            %v932 = vsel %vm916, %v564, -inf
            %v933 = vsel %vm917, %v565, -inf
            %v934 = vsel %vm918, %v566, -inf
            %v935 = vsel %vm919, %v567, -inf
            %v936 = vsel %vm920, %v568, -inf
            %v937 = vsel %vm921, %v569, -inf
            %v938 = vmax.f32 %v922, %v923
            %939 = vmax.xlane.f32.xlu0 %v938
            %v940 = vpop.xlane.xlu0 %939
            %v941 = vmax.f32 %v924, %v925
            %942 = vmax.xlane.f32.xlu0 %v941
            %v943 = vpop.xlane.xlu0 %942
            %v944 = vmax.f32 %v926, %v927
            %945 = vmax.xlane.f32.xlu0 %v944
            %v946 = vpop.xlane.xlu0 %945
            %v947 = vmax.f32 %v928, %v929
            %948 = vmax.xlane.f32.xlu0 %v947
            %v949 = vpop.xlane.xlu0 %948
            %v950 = vmax.f32 %v930, %v931
            %951 = vmax.xlane.f32.xlu0 %v950
            %v952 = vpop.xlane.xlu0 %951
            %v953 = vmax.f32 %v932, %v933
            %954 = vmax.xlane.f32.xlu0 %v953
            %v955 = vpop.xlane.xlu0 %954
            %v956 = vmax.f32 %v934, %v935
            %957 = vmax.xlane.f32.xlu0 %v956
            %v958 = vpop.xlane.xlu0 %957
            %v959 = vmax.f32 %v936, %v937
            %960 = vmax.xlane.f32.xlu0 %v959
            %v961 = vpop.xlane.xlu0 %960
            %vm962 = vcmp.lt.f32.partialorder %v554, %v940
            %vm963 = vcmp.lt.f32.partialorder %v555, %v940
            %vm964 = vcmp.lt.f32.partialorder %v556, %v943
            %vm965 = vcmp.lt.f32.partialorder %v557, %v943
            %vm966 = vcmp.lt.f32.partialorder %v558, %v946
            %vm967 = vcmp.lt.f32.partialorder %v559, %v946
            %vm968 = vcmp.lt.f32.partialorder %v560, %v949
            %vm969 = vcmp.lt.f32.partialorder %v561, %v949
            %vm970 = vcmp.lt.f32.partialorder %v562, %v952
            %vm971 = vcmp.lt.f32.partialorder %v563, %v952
            %vm972 = vcmp.lt.f32.partialorder %v564, %v955
            %vm973 = vcmp.lt.f32.partialorder %v565, %v955
            %vm974 = vcmp.lt.f32.partialorder %v566, %v958
            %vm975 = vcmp.lt.f32.partialorder %v567, %v958
            %vm976 = vcmp.lt.f32.partialorder %v568, %v961
            %vm977 = vcmp.lt.f32.partialorder %v569, %v961
            %v978 = vsel %vm962, %v554, -inf
            %v979 = vsel %vm963, %v555, -inf
            %v980 = vsel %vm964, %v556, -inf
            %v981 = vsel %vm965, %v557, -inf
            %v982 = vsel %vm966, %v558, -inf
            %v983 = vsel %vm967, %v559, -inf
            %v984 = vsel %vm968, %v560, -inf
            %v985 = vsel %vm969, %v561, -inf
            %v986 = vsel %vm970, %v562, -inf
            %v987 = vsel %vm971, %v563, -inf
            %v988 = vsel %vm972, %v564, -inf
            %v989 = vsel %vm973, %v565, -inf
            %v990 = vsel %vm974, %v566, -inf
            %v991 = vsel %vm975, %v567, -inf
            %v992 = vsel %vm976, %v568, -inf
            %v993 = vsel %vm977, %v569, -inf
            %v994 = vmax.f32 %v978, %v979
            %995 = vmax.xlane.f32.xlu0 %v994
            %v996 = vpop.xlane.xlu0 %995
            %v997 = vmax.f32 %v980, %v981
            %998 = vmax.xlane.f32.xlu0 %v997
            %v999 = vpop.xlane.xlu0 %998
            %v1000 = vmax.f32 %v982, %v983
            %1001 = vmax.xlane.f32.xlu0 %v1000
            %v1002 = vpop.xlane.xlu0 %1001
            %v1003 = vmax.f32 %v984, %v985
            %1004 = vmax.xlane.f32.xlu0 %v1003
            %v1005 = vpop.xlane.xlu0 %1004
            %v1006 = vmax.f32 %v986, %v987
            %1007 = vmax.xlane.f32.xlu0 %v1006
            %v1008 = vpop.xlane.xlu0 %1007
            %v1009 = vmax.f32 %v988, %v989
            %1010 = vmax.xlane.f32.xlu0 %v1009
            %v1011 = vpop.xlane.xlu0 %1010
            %v1012 = vmax.f32 %v990, %v991
            %1013 = vmax.xlane.f32.xlu0 %v1012
            %v1014 = vpop.xlane.xlu0 %1013
            %v1015 = vmax.f32 %v992, %v993
            %1016 = vmax.xlane.f32.xlu0 %v1015
            %v1017 = vpop.xlane.xlu0 %1016
            %vm1018 = vcmask 7168
            %1019 = vst.msk [vmem:[#allocation3] sm:$0xff] %vm1018, %v996
            %1020 = vst.msk [vmem:[#allocation3 + $0x8] sm:$0xff] %vm1018, %v999
            %1021 = vst.msk [vmem:[#allocation3 + $0x10] sm:$0xff] %vm1018, %v1002
            %1022 = vst.msk [vmem:[#allocation3 + $0x18] sm:$0xff] %vm1018, %v1005
            %1023 = vst.msk [vmem:[#allocation3 + $0x20] sm:$0xff] %vm1018, %v1008
            %1024 = vst.msk [vmem:[#allocation3 + $0x28] sm:$0xff] %vm1018, %v1011
            %1025 = vst.msk [vmem:[#allocation3 + $0x30] sm:$0xff] %vm1018, %v1014
            %1026 = vst.msk [vmem:[#allocation3 + $0x38] sm:$0xff] %vm1018, %v1017
            %1027 = vst [vmem:[#allocation4] sm:$0xff] 0.0
            %1028 = vst [vmem:[#allocation4 + $0x8] sm:$0xff] 0.0
            %1029 = vst [vmem:[#allocation4 + $0x10] sm:$0xff] 0.0
            %1030 = vst [vmem:[#allocation4 + $0x18] sm:$0xff] 0.0
            %1031 = vst [vmem:[#allocation4 + $0x20] sm:$0xff] 0.0
            %1032 = vst [vmem:[#allocation4 + $0x28] sm:$0xff] 0.0
            %1033 = vst [vmem:[#allocation4 + $0x30] sm:$0xff] 0.0
            %1034 = vst [vmem:[#allocation4 + $0x38] sm:$0xff] 0.0
          $region68: #{tpu_custom_call.1} parent=63 // pred_fallthru
            _
          %v1035 = vld [vmem:[#allocation3] sm:$0xff]
          %v1036 = vld [vmem:[#allocation3 + $0x8] sm:$0xff]
          %v1037 = vld [vmem:[#allocation3 + $0x10] sm:$0xff]
          %v1038 = vld [vmem:[#allocation3 + $0x18] sm:$0xff]
          %v1039 = vld [vmem:[#allocation3 + $0x20] sm:$0xff]
          %v1040 = vld [vmem:[#allocation3 + $0x28] sm:$0xff]
          %v1041 = vld [vmem:[#allocation3 + $0x30] sm:$0xff]
          %v1042 = vld [vmem:[#allocation3 + $0x38] sm:$0xff]
          %s1043 = smul.u32 %s31, 16
          %s1044 = smul.addr %s1043, 8
          %s1045 = scalar_lea.vmem [#allocation2], %s1044
          %v1046 = vld [vmem:[%s1045] sm:$0xff]
          %v1047 = vld [vmem:[%s1045 + $0x8] sm:$0xff]
          %v1048 = vld [vmem:[%s1045 + $0x10] sm:$0xff]
          %v1049 = vld [vmem:[%s1045 + $0x18] sm:$0xff]
          %v1050 = vld [vmem:[%s1045 + $0x20] sm:$0xff]
          %v1051 = vld [vmem:[%s1045 + $0x28] sm:$0xff]
          %v1052 = vld [vmem:[%s1045 + $0x30] sm:$0xff]
          %v1053 = vld [vmem:[%s1045 + $0x38] sm:$0xff]
          %v1054 = vld [vmem:[%s1045 + $0x40] sm:$0xff]
          %v1055 = vld [vmem:[%s1045 + $0x48] sm:$0xff]
          %v1056 = vld [vmem:[%s1045 + $0x50] sm:$0xff]
          %v1057 = vld [vmem:[%s1045 + $0x58] sm:$0xff]
          %v1058 = vld [vmem:[%s1045 + $0x60] sm:$0xff]
          %v1059 = vld [vmem:[%s1045 + $0x68] sm:$0xff]
          %v1060 = vld [vmem:[%s1045 + $0x70] sm:$0xff]
          %v1061 = vld [vmem:[%s1045 + $0x78] sm:$0xff]
          %1063 = vset.pattern.permute.xlu0 0
          %1064 = vperm.xlu0 %1063, %v1035
          %v1065 = vpop.permute.xlu0 %1064
          %1068 = vset.pattern.permute.xlu0 0
          %1069 = vperm.xlu0 %1068, %v1036
          %v1070 = vpop.permute.xlu0 %1069
          %1073 = vset.pattern.permute.xlu0 0
          %1074 = vperm.xlu0 %1073, %v1037
          %v1075 = vpop.permute.xlu0 %1074
          %1078 = vset.pattern.permute.xlu0 0
          %1079 = vperm.xlu0 %1078, %v1038
          %v1080 = vpop.permute.xlu0 %1079
          %1083 = vset.pattern.permute.xlu0 0
          %1084 = vperm.xlu0 %1083, %v1039
          %v1085 = vpop.permute.xlu0 %1084
          %1088 = vset.pattern.permute.xlu0 0
          %1089 = vperm.xlu0 %1088, %v1040
          %v1090 = vpop.permute.xlu0 %1089
          %1093 = vset.pattern.permute.xlu0 0
          %1094 = vperm.xlu0 %1093, %v1041
          %v1095 = vpop.permute.xlu0 %1094
          %1098 = vset.pattern.permute.xlu0 0
          %1099 = vperm.xlu0 %1098, %v1042
          %v1100 = vpop.permute.xlu0 %1099
          %vm1102 = vcmp.ge.f32.partialorder %v1046, %v1065
          %vm1103 = vcmp.ge.f32.partialorder %v1047, %v1065
          %vm1104 = vcmp.ge.f32.partialorder %v1048, %v1070
          %vm1105 = vcmp.ge.f32.partialorder %v1049, %v1070
          %vm1106 = vcmp.ge.f32.partialorder %v1050, %v1075
          %vm1107 = vcmp.ge.f32.partialorder %v1051, %v1075
          %vm1108 = vcmp.ge.f32.partialorder %v1052, %v1080
          %vm1109 = vcmp.ge.f32.partialorder %v1053, %v1080
          %vm1110 = vcmp.ge.f32.partialorder %v1054, %v1085
          %vm1111 = vcmp.ge.f32.partialorder %v1055, %v1085
          %vm1112 = vcmp.ge.f32.partialorder %v1056, %v1090
          %vm1113 = vcmp.ge.f32.partialorder %v1057, %v1090
          %vm1114 = vcmp.ge.f32.partialorder %v1058, %v1095
          %vm1115 = vcmp.ge.f32.partialorder %v1059, %v1095
          %vm1116 = vcmp.ge.f32.partialorder %v1060, %v1100
          %vm1117 = vcmp.ge.f32.partialorder %v1061, %v1100
          %v1118 = vmax.f32 %v1046, 0.0
          %v1119 = vmax.f32 %v1047, 0.0
          %v1120 = vmax.f32 %v1048, 0.0
          %v1121 = vmax.f32 %v1049, 0.0
          %v1122 = vmax.f32 %v1050, 0.0
          %v1123 = vmax.f32 %v1051, 0.0
          %v1124 = vmax.f32 %v1052, 0.0
          %v1125 = vmax.f32 %v1053, 0.0
          %v1126 = vmax.f32 %v1054, 0.0
          %v1127 = vmax.f32 %v1055, 0.0
          %v1128 = vmax.f32 %v1056, 0.0
          %v1129 = vmax.f32 %v1057, 0.0
          %v1130 = vmax.f32 %v1058, 0.0
          %v1131 = vmax.f32 %v1059, 0.0
          %v1132 = vmax.f32 %v1060, 0.0
          %v1133 = vmax.f32 %v1061, 0.0
          %v1134 = vsel %vm1102, %v1118, 0.0
          %v1135 = vsel %vm1103, %v1119, 0.0
          %v1136 = vsel %vm1104, %v1120, 0.0
          %v1137 = vsel %vm1105, %v1121, 0.0
          %v1138 = vsel %vm1106, %v1122, 0.0
          %v1139 = vsel %vm1107, %v1123, 0.0
          %v1140 = vsel %vm1108, %v1124, 0.0
          %v1141 = vsel %vm1109, %v1125, 0.0
          %v1142 = vsel %vm1110, %v1126, 0.0
          %v1143 = vsel %vm1111, %v1127, 0.0
          %v1144 = vsel %vm1112, %v1128, 0.0
          %v1145 = vsel %vm1113, %v1129, 0.0
          %v1146 = vsel %vm1114, %v1130, 0.0
          %v1147 = vsel %vm1115, %v1131, 0.0
          %v1148 = vsel %vm1116, %v1132, 0.0
          %v1149 = vsel %vm1117, %v1133, 0.0
          %1150 = vst [vmem:[%s379] sm:$0xff] %v1134
          %1151 = vst [vmem:[%s379 + $0x8] sm:$0xff] %v1135
          %1152 = vst [vmem:[%s379 + $0x10] sm:$0xff] %v1136
          %1153 = vst [vmem:[%s379 + $0x18] sm:$0xff] %v1137
          %1154 = vst [vmem:[%s379 + $0x20] sm:$0xff] %v1138
          %1155 = vst [vmem:[%s379 + $0x28] sm:$0xff] %v1139
          %1156 = vst [vmem:[%s379 + $0x30] sm:$0xff] %v1140
          %1157 = vst [vmem:[%s379 + $0x38] sm:$0xff] %v1141
          %1158 = vst [vmem:[%s379 + $0x40] sm:$0xff] %v1142
          %1159 = vst [vmem:[%s379 + $0x48] sm:$0xff] %v1143
          %1160 = vst [vmem:[%s379 + $0x50] sm:$0xff] %v1144
          %1161 = vst [vmem:[%s379 + $0x58] sm:$0xff] %v1145
          %1162 = vst [vmem:[%s379 + $0x60] sm:$0xff] %v1146
          %1163 = vst [vmem:[%s379 + $0x68] sm:$0xff] %v1147
          %1164 = vst [vmem:[%s379 + $0x70] sm:$0xff] %v1148
          %1165 = vst [vmem:[%s379 + $0x78] sm:$0xff] %v1149
          %v1166 = vld [vmem:[#allocation4] sm:$0xff]
          %v1167 = vld [vmem:[#allocation4 + $0x8] sm:$0xff]
          %v1168 = vld [vmem:[#allocation4 + $0x10] sm:$0xff]
          %v1169 = vld [vmem:[#allocation4 + $0x18] sm:$0xff]
          %v1170 = vld [vmem:[#allocation4 + $0x20] sm:$0xff]
          %v1171 = vld [vmem:[#allocation4 + $0x28] sm:$0xff]
          %v1172 = vld [vmem:[#allocation4 + $0x30] sm:$0xff]
          %v1173 = vld [vmem:[#allocation4 + $0x38] sm:$0xff]
          %v1174 = vld [vmem:[#allocation11] sm:$0xff]
          %v1175 = vld [vmem:[#allocation11 + $0x8] sm:$0xff]
          %v1176 = vld [vmem:[#allocation11 + $0x10] sm:$0xff]
          %v1177 = vld [vmem:[#allocation11 + $0x18] sm:$0xff]
          %v1178 = vld [vmem:[#allocation11 + $0x20] sm:$0xff]
          %v1179 = vld [vmem:[#allocation11 + $0x28] sm:$0xff]
          %v1180 = vld [vmem:[#allocation11 + $0x30] sm:$0xff]
          %v1181 = vld [vmem:[#allocation11 + $0x38] sm:$0xff]
          %v1182 = vld [vmem:[#allocation11 + $0x40] sm:$0xff]
          %v1183 = vld [vmem:[#allocation11 + $0x48] sm:$0xff]
          %v1184 = vld [vmem:[#allocation11 + $0x50] sm:$0xff]
          %v1185 = vld [vmem:[#allocation11 + $0x58] sm:$0xff]
          %v1186 = vld [vmem:[#allocation11 + $0x60] sm:$0xff]
          %v1187 = vld [vmem:[#allocation11 + $0x68] sm:$0xff]
          %v1188 = vld [vmem:[#allocation11 + $0x70] sm:$0xff]
          %v1189 = vld [vmem:[#allocation11 + $0x78] sm:$0xff]
          %v1190 = vld [vmem:[#allocation11 + $0x80] sm:$0xff]
          %v1191 = vld [vmem:[#allocation11 + $0x88] sm:$0xff]
          %v1192 = vld [vmem:[#allocation11 + $0x90] sm:$0xff]
          %v1193 = vld [vmem:[#allocation11 + $0x98] sm:$0xff]
          %v1194 = vld [vmem:[#allocation11 + $0xa0] sm:$0xff]
          %v1195 = vld [vmem:[#allocation11 + $0xa8] sm:$0xff]
          %v1196 = vld [vmem:[#allocation11 + $0xb0] sm:$0xff]
          %v1197 = vld [vmem:[#allocation11 + $0xb8] sm:$0xff]
          %v1198 = vld [vmem:[#allocation11 + $0xc0] sm:$0xff]
          %v1199 = vld [vmem:[#allocation11 + $0xc8] sm:$0xff]
          %v1200 = vld [vmem:[#allocation11 + $0xd0] sm:$0xff]
          %v1201 = vld [vmem:[#allocation11 + $0xd8] sm:$0xff]
          %v1202 = vld [vmem:[#allocation11 + $0xe0] sm:$0xff]
          %v1203 = vld [vmem:[#allocation11 + $0xe8] sm:$0xff]
          %v1204 = vld [vmem:[#allocation11 + $0xf0] sm:$0xff]
          %v1205 = vld [vmem:[#allocation11 + $0xf8] sm:$0xff]
          %1206 = vmatpush.msra.mxu0 %v1189
          %1207 = vmatpush.msra.mxu0 %v1188
          %1208 = vmatpush.msra.mxu0 %v1187
          %1209 = vmatpush.msra.mxu0 %v1186
          %1210 = vmatpush.msra.mxu0 %v1185
          %1211 = vmatpush.msra.mxu0 %v1184
          %1212 = vmatpush.msra.mxu0 %v1183
          %1213 = vmatpush.msra.mxu0 %v1182
          %1214 = vmatpush.msra.mxu0 %v1181
          %1215 = vmatpush.msra.mxu0 %v1180
          %1216 = vmatpush.msra.mxu0 %v1179
          %1217 = vmatpush.msra.mxu0 %v1178
          %1218 = vmatpush.msra.mxu0 %v1177
          %1219 = vmatpush.msra.mxu0 %v1176
          %1220 = vmatpush.msra.mxu0 %v1175
          %1221 = vmatpush.msra.mxu0 %v1174
          %1222 = vmatmul.f32.gmra.mxu0 %v1134
          %v1223 = vpop.f32.mrf.mxu0
          %v1224 = vadd.f32 0.0, %v1223
          %1225 = vmatmul.f32.gmra.mxu0 %v1136
          %v1226 = vpop.f32.mrf.mxu0
          %v1227 = vadd.f32 0.0, %v1226
          %1228 = vmatmul.f32.gmra.mxu0 %v1138
          %v1229 = vpop.f32.mrf.mxu0
          %v1230 = vadd.f32 0.0, %v1229
          %1231 = vmatmul.f32.gmra.mxu0 %v1140
          %v1232 = vpop.f32.mrf.mxu0
          %v1233 = vadd.f32 0.0, %v1232
          %1234 = vmatmul.f32.gmra.mxu0 %v1142
          %v1235 = vpop.f32.mrf.mxu0
          %v1236 = vadd.f32 0.0, %v1235
          %1237 = vmatmul.f32.gmra.mxu0 %v1144
          %v1238 = vpop.f32.mrf.mxu0
          %v1239 = vadd.f32 0.0, %v1238
          %1240 = vmatmul.f32.gmra.mxu0 %v1146
          %v1241 = vpop.f32.mrf.mxu0
          %v1242 = vadd.f32 0.0, %v1241
          %1243 = vmatmul.f32.gmra.mxu0 %v1148
          %v1244 = vpop.f32.mrf.mxu0
          %v1245 = vadd.f32 0.0, %v1244
          %1246 = vdwg.mxu0
          %1247 = vmatpush.msra.mxu0 %v1205
          %1248 = vmatpush.msra.mxu0 %v1204
          %1249 = vmatpush.msra.mxu0 %v1203
          %1250 = vmatpush.msra.mxu0 %v1202
          %1251 = vmatpush.msra.mxu0 %v1201
          %1252 = vmatpush.msra.mxu0 %v1200
          %1253 = vmatpush.msra.mxu0 %v1199
          %1254 = vmatpush.msra.mxu0 %v1198
          %1255 = vmatpush.msra.mxu0 %v1197
          %1256 = vmatpush.msra.mxu0 %v1196
          %1257 = vmatpush.msra.mxu0 %v1195
          %1258 = vmatpush.msra.mxu0 %v1194
          %1259 = vmatpush.msra.mxu0 %v1193
          %1260 = vmatpush.msra.mxu0 %v1192
          %1261 = vmatpush.msra.mxu0 %v1191
          %1262 = vmatpush.msra.mxu0 %v1190
          %1263 = vmatmul.f32.gmra.mxu0 %v1135
          %v1264 = vpop.f32.mrf.mxu0
          %v1265 = vadd.f32 %v1224, %v1264
          %1266 = vmatmul.f32.gmra.mxu0 %v1137
          %v1267 = vpop.f32.mrf.mxu0
          %v1268 = vadd.f32 %v1227, %v1267
          %1269 = vmatmul.f32.gmra.mxu0 %v1139
          %v1270 = vpop.f32.mrf.mxu0
          %v1271 = vadd.f32 %v1230, %v1270
          %1272 = vmatmul.f32.gmra.mxu0 %v1141
          %v1273 = vpop.f32.mrf.mxu0
          %v1274 = vadd.f32 %v1233, %v1273
          %1275 = vmatmul.f32.gmra.mxu0 %v1143
          %v1276 = vpop.f32.mrf.mxu0
          %v1277 = vadd.f32 %v1236, %v1276
          %1278 = vmatmul.f32.gmra.mxu0 %v1145
          %v1279 = vpop.f32.mrf.mxu0
          %v1280 = vadd.f32 %v1239, %v1279
          %1281 = vmatmul.f32.gmra.mxu0 %v1147
          %v1282 = vpop.f32.mrf.mxu0
          %v1283 = vadd.f32 %v1242, %v1282
          %1284 = vmatmul.f32.gmra.mxu0 %v1149
          %v1285 = vpop.f32.mrf.mxu0
          %v1286 = vadd.f32 %v1245, %v1285
          %1287 = vdwg.mxu0
          %v1288 = vadd.f32 %v1166, %v1265
          %v1289 = vadd.f32 %v1167, %v1268
          %v1290 = vadd.f32 %v1168, %v1271
          %v1291 = vadd.f32 %v1169, %v1274
          %v1292 = vadd.f32 %v1170, %v1277
          %v1293 = vadd.f32 %v1171, %v1280
          %v1294 = vadd.f32 %v1172, %v1283
          %v1295 = vadd.f32 %v1173, %v1286
          %1296 = vst [vmem:[#allocation4] sm:$0xff] %v1288
          %1297 = vst [vmem:[#allocation4 + $0x8] sm:$0xff] %v1289
          %1298 = vst [vmem:[#allocation4 + $0x10] sm:$0xff] %v1290
          %1299 = vst [vmem:[#allocation4 + $0x18] sm:$0xff] %v1291
          %1300 = vst [vmem:[#allocation4 + $0x20] sm:$0xff] %v1292
          %1301 = vst [vmem:[#allocation4 + $0x28] sm:$0xff] %v1293
          %1302 = vst [vmem:[#allocation4 + $0x30] sm:$0xff] %v1294
          %1303 = vst [vmem:[#allocation4 + $0x38] sm:$0xff] %v1295
          // Predicated region
          $region69: #{tpu_custom_call.1} parent=63 // pred_check
            %p1304 = pneg %p550
          $region70: #{tpu_custom_call.1} parent=63 // pred_check_branch
            %1306 = sbr.rel (%p1304) target = $region72
          $region71: #{tpu_custom_call.1} parent=63 // pred_region
            %v1307 = vld [vmem:[#allocation4] sm:$0xff]
            %v1308 = vld [vmem:[#allocation4 + $0x8] sm:$0xff]
            %v1309 = vld [vmem:[#allocation4 + $0x10] sm:$0xff]
            %v1310 = vld [vmem:[#allocation4 + $0x18] sm:$0xff]
            %v1311 = vld [vmem:[#allocation4 + $0x20] sm:$0xff]
            %v1312 = vld [vmem:[#allocation4 + $0x28] sm:$0xff]
            %v1313 = vld [vmem:[#allocation4 + $0x30] sm:$0xff]
            %v1314 = vld [vmem:[#allocation4 + $0x38] sm:$0xff]
            %v1315 = vld [vmem:[%s4] sm:$0x1]
            %v1317 = vperm.slane %v1315, 0
            %v1319 = vadd.f32 %v1307, %v1317
            %v1320 = vadd.f32 %v1308, %v1317
            %v1321 = vadd.f32 %v1309, %v1317
            %v1322 = vadd.f32 %v1310, %v1317
            %v1323 = vadd.f32 %v1311, %v1317
            %v1324 = vadd.f32 %v1312, %v1317
            %v1325 = vadd.f32 %v1313, %v1317
            %v1326 = vadd.f32 %v1314, %v1317
            %v1327 = vld [vmem:[#allocation5] sm:$0xff]
            %v1328 = vld [vmem:[#allocation5 + $0x8] sm:$0xff]
            %v1329 = vld [vmem:[#allocation5 + $0x10] sm:$0xff]
            %v1330 = vld [vmem:[#allocation5 + $0x18] sm:$0xff]
            %v1331 = vld [vmem:[#allocation5 + $0x20] sm:$0xff]
            %v1332 = vld [vmem:[#allocation5 + $0x28] sm:$0xff]
            %v1333 = vld [vmem:[#allocation5 + $0x30] sm:$0xff]
            %v1334 = vld [vmem:[#allocation5 + $0x38] sm:$0xff]
            %v1335 = vsub.f32 %v1319, %v1327
            %v1336 = vsub.f32 %v1320, %v1328
            %v1337 = vsub.f32 %v1321, %v1329
            %v1338 = vsub.f32 %v1322, %v1330
            %v1339 = vsub.f32 %v1323, %v1331
            %v1340 = vsub.f32 %v1324, %v1332
            %v1341 = vsub.f32 %v1325, %v1333
            %v1342 = vsub.f32 %v1326, %v1334
            %v1343 = vmul.f32 %v1335, %v1335
            %v1344 = vmul.f32 %v1336, %v1336
            %v1345 = vmul.f32 %v1337, %v1337
            %v1346 = vmul.f32 %v1338, %v1338
            %v1347 = vmul.f32 %v1339, %v1339
            %v1348 = vmul.f32 %v1340, %v1340
            %v1349 = vmul.f32 %v1341, %v1341
            %v1350 = vmul.f32 %v1342, %v1342
            %1351 = vadd.xlane.f32.xlu0 %v1343
            %v1352 = vpop.xlane.xlu0 %1351
            %1353 = vadd.xlane.f32.xlu0 %v1344
            %v1354 = vpop.xlane.xlu0 %1353
            %1355 = vadd.xlane.f32.xlu0 %v1345
            %v1356 = vpop.xlane.xlu0 %1355
            %1357 = vadd.xlane.f32.xlu0 %v1346
            %v1358 = vpop.xlane.xlu0 %1357
            %1359 = vadd.xlane.f32.xlu0 %v1347
            %v1360 = vpop.xlane.xlu0 %1359
            %1361 = vadd.xlane.f32.xlu0 %v1348
            %v1362 = vpop.xlane.xlu0 %1361
            %1363 = vadd.xlane.f32.xlu0 %v1349
            %v1364 = vpop.xlane.xlu0 %1363
            %1365 = vadd.xlane.f32.xlu0 %v1350
            %v1366 = vpop.xlane.xlu0 %1365
            %1367 = vst [vmem:[#allocation13] sm:$0xff] %v1352
            %1368 = vst [vmem:[#allocation13 + $0x8] sm:$0xff] %v1354
            %1369 = vst [vmem:[#allocation13 + $0x10] sm:$0xff] %v1356
            %1370 = vst [vmem:[#allocation13 + $0x18] sm:$0xff] %v1358
            %1371 = vst [vmem:[#allocation13 + $0x20] sm:$0xff] %v1360
            %1372 = vst [vmem:[#allocation13 + $0x28] sm:$0xff] %v1362
            %1373 = vst [vmem:[#allocation13 + $0x30] sm:$0xff] %v1364
            %1374 = vst [vmem:[#allocation13 + $0x38] sm:$0xff] %v1366
          $region72: #{tpu_custom_call.1} parent=63 // pred_fallthru
            _
        $region64: #{tpu_custom_call.1} parent=39 // pred_fallthru
          _
        %s1375 = sand.u32 %s190, 1
        %s1376 = scalar_lea.sflag [#allocation7], %s1375
        %s1377 = sand.u32 %s190, 1
        %s1378 = smul.addr %s1377, 128
        %s1379 = scalar_lea.vmem [#allocation12], %s1378
        // Predicated region
        $region73: #{tpu_custom_call.1} parent=39 // pred_check
          %p1380 = pneg %p200
        $region74: #{tpu_custom_call.1} parent=39 // pred_check_branch
          %1382 = sbr.rel (%p1380) target = $region76
        $region75: #{tpu_custom_call.1} parent=39 // pred_region
          %s1383 = smul.u32 %s31, %s30
          %s1384 = smul.u32 8, %s29
          %s1385 = smul.u32 2, %s1383
          %1387 = vsyncadd %s1376, 0
          %s1388 = smul.addr %s1384, 2
          %s1389 = sadd.s32 %s1385, %s1388
          %s1390 = smul.addr %s1389, 8
          %s1391 = scalar_lea.hbm %s5, %s1390
          %s1392 = sshll.u32 %s1379, 4
          %s1393 = int_to_ptr.vmem [resolvable:$true] %s1392
          %s1394 = sshll.u32 %s1391, 4
          %s1395 = int_to_ptr.hbm [resolvable:$true] %s1394
          %1400 = dma.vmem_to_hbm [thread:$0]  %s1393, 2048, %s1395, %s1376, 256, 256, 16
        $region76: #{tpu_custom_call.1} parent=39 // pred_fallthru
          _
        // Predicated region
        $region77: #{tpu_custom_call.1} parent=39 // pred_check
          %p1401 = pneg %p226
        $region78: #{tpu_custom_call.1} parent=39 // pred_check_branch
          %1403 = sbr.rel (%p1401) target = $region80
        $region79: #{tpu_custom_call.1} parent=39 // pred_region
          %s1404 = smul.u32 8, %s29
          %1406 = vsyncadd [#allocation14], 0
          %s1407 = smul.addr %s1404, 8
          %s1408 = scalar_lea.hbm %s6, %s1407
          %s1409 = sshll.u32 [#allocation13], 4
          %s1410 = int_to_ptr.vmem [resolvable:$true] %s1409
          %s1411 = sshll.u32 %s1408, 4
          %s1412 = int_to_ptr.hbm [resolvable:$true] %s1411
          %1417 = dma.vmem_to_hbm [thread:$0]  %s1410, 1024, %s1412, [#allocation14], 128, 128, 8
        $region80: #{tpu_custom_call.1} parent=39 // pred_fallthru
          _
        // Predicated region
        $region81: #{tpu_custom_call.1} parent=39 // pred_check
          %p1418 = pneg %p226
        $region82: #{tpu_custom_call.1} parent=39 // pred_check_branch
          %1420 = sbr.rel (%p1418) target = $region84
        $region83: #{tpu_custom_call.1} parent=39 // pred_region
          %1422 = dma.done [#allocation14], 1024
        $region84: #{tpu_custom_call.1} parent=39 // pred_fallthru
          _
      $region40: #{tpu_custom_call.1} parent=5 // pred_fallthru
        _
      %p1423 = scmp.le.s32.totalorder 2, %s19
      // Predicated region
      $region85: #{tpu_custom_call.1} parent=5 // pred_check
        %p1424 = pneg %p1423
      $region86: #{tpu_custom_call.1} parent=5 // pred_check_branch
        %1426 = sbr.rel (%p1424) target = $region88
      $region87: #{tpu_custom_call.1} parent=5 // pred_region
        %s1427 = ssub.s32 %s19, 2
        // Predicated region
        $region89: #{tpu_custom_call.1} parent=87 // pred_check
          %p1428 = pneg %p206
        $region90: #{tpu_custom_call.1} parent=87 // pred_check_branch
          %1430 = sbr.rel (%p1428) target = $region92
        $region91: #{tpu_custom_call.1} parent=87 // pred_region
          %s1431 = sand.u32 %s191, 1
          %s1432 = scalar_lea.sflag [#allocation7], %s1431
          %s1433 = sand.u32 %s191, 1
          %s1434 = smul.addr %s1433, 128
          %s1435 = scalar_lea.vmem [#allocation12], %s1434
          %1437 = dma.done %s1432, 2048
        $region92: #{tpu_custom_call.1} parent=87 // pred_fallthru
          _
      $region88: #{tpu_custom_call.1} parent=5 // pred_fallthru
        _
    $region6: #{tpu_custom_call.1} parent=1 // loop_footer
      %s23 = sadd.s32 1, %s19
    $region7: #{tpu_custom_call.1} parent=1 // loop_footer_branch
      %18 = sbr.rel target = $region3
    $region8: #{tpu_custom_call.1} parent=1 // loop_exit
      _
    %1438 = vsyncpa [#allocation6], 1
    %s1439 = scalar_lea.sflag [#allocation6], 1
    %1440 = vsyncpa %s1439, 1
    %1441 = vsyncpa [#allocation9], 1
    %1442 = vsyncpa [#allocation7], 1
    %s1443 = scalar_lea.sflag [#allocation7], 1
    %1444 = vsyncpa %s1443, 1
    %1445 = vsyncpa [#allocation14], 1

</llo_original>
